<compile_context>
chip_gen: v5e
topology: v5e:2x2
jax: 0.10.0
libtpu: 0.0.40
codegen_flags: <defaults>
</compile_context>

<pallas_src>
import functools

import jax
import jax.numpy as jnp
from jax import lax
from jax.experimental import pallas as pl
from jax.experimental.pallas import tpu as pltpu

_K = 31                 # avg_pool2d kernel size
_PAD = 15               # avg_pool2d padding
_DIV = float(_K * _K)   # count_include_pad=True -> constant divisor (31*31)


def _structure_loss_kernel(ah_ref, aw_ref, pred_ref, mask_ref, out_ref, *,
                           bt, inv_div):
    # Resident band matrices (constant index_map -> loaded/DMA'd once, kept in VMEM).
    a_h = ah_ref[...]                                   # (H, H) bf16
    a_w = aw_ref[...]                                   # (W, W) bf16
    # Hoisted out of the per-image loop (JAX does not CSE broadcast_in_dim).
    lane = lax.broadcasted_iota(jnp.int32, (8, 128), 1)

    def body(bi, carry):
        x = pred_ref[bi]                                # (H, W) logits, f32
        m = mask_ref[bi]                                # (H, W) target mask, f32

        # 31x31 box average pool (stride 1, pad 15, count_include_pad=True):
        #   pooled = (A_H @ m @ A_W) * (1/961),  A[i, r] = 1 iff |i - r| <= 15
        # bf16 operands -> native MXU path; f32 accumulation keeps it exact for
        # binary masks (integer partial sums <= 961).
        m16 = m.astype(jnp.bfloat16)
        tmp = jnp.dot(a_h, m16, preferred_element_type=jnp.float32)        # (H, W)
        pooled = jnp.dot(tmp.astype(jnp.bfloat16), a_w,
                         preferred_element_type=jnp.float32) * inv_div     # (H, W)

        weit = 1.0 + 5.0 * jnp.abs(pooled - m)

        # One exp feeds both the BCE log-term and the sigmoid; one reciprocal.
        e = jnp.exp(-jnp.abs(x))                                            # EUP
        bce = jnp.maximum(x, 0.0) - x * m + jnp.log(1.0 + e)
        inv = pl.reciprocal(1.0 + e, approx=False)      # exact: summed over H*W terms
        sig = jnp.where(x >= 0.0, inv, e * inv)

        bce_s = jnp.sum(bce, keepdims=True)                    # (1, 1)
        inter_s = jnp.sum(sig * m * weit, keepdims=True)       # (1, 1)
        union_s = jnp.sum((sig + m) * weit, keepdims=True)     # (1, 1)

        # Lane-dense per-image partials: lane 0 = bce_sum, 1 = inter, 2 = union.
        tile = jnp.where(lane == 0, bce_s,
               jnp.where(lane == 1, inter_s,
               jnp.where(lane == 2, union_s, 0.0)))            # (8, 128)
        out_ref[bi] = tile
        return carry

    lax.fori_loop(0, bt, body, 0, unroll=True)


def structure_loss(pred, mask, *, bt=None):
    """pred, mask: NCHW float arrays (PyTorch convention). Returns scalar loss."""
    N, C, H, W = pred.shape
    B = N * C
    p = pred.reshape(B, H, W).astype(jnp.float32)
    m = mask.reshape(B, H, W).astype(jnp.float32)

    if bt is None:
        # 2 inputs x 2 pipeline buffers x f32; keep the streamed working set small
        # (<= ~8 MiB) so the kernel fits the default scoped VMEM on every generation
        # (incl. v7x's 32 MiB default / 64 MiB physical) alongside A_H/A_W + temps.
        per_image_bytes = 2 * 2 * H * W * 4
        bt = max(1, (8 * 1024 * 1024) // per_image_bytes)
        bt = int(min(bt, B, 8))
    bt = int(max(1, min(bt, B)))

    nb = pl.cdiv(B, bt)
    b_pad = nb * bt
    if b_pad != B:
        extra = b_pad - B
        p = jnp.pad(p, ((0, extra), (0, 0), (0, 0)))
        m = jnp.pad(m, ((0, extra), (0, 0), (0, 0)))

    # Band matrices for the 31x31 box filter, built once (bf16 holds 0/1 exactly).
    def band(n):
        r = jnp.arange(n)
        return (jnp.abs(r[:, None] - r[None, :]) <= _PAD).astype(jnp.bfloat16)

    a_h = band(H)
    a_w = band(W)

    kernel = functools.partial(_structure_loss_kernel, bt=bt, inv_div=1.0 / _DIV)
    partials = pl.pallas_call(
        kernel,
        out_shape=jax.ShapeDtypeStruct((b_pad, 8, 128), jnp.float32),
        grid_spec=pltpu.PrefetchScalarGridSpec(
            num_scalar_prefetch=0,
            grid=(nb,),
            in_specs=[
                pl.BlockSpec((H, H), lambda i: (0, 0)),        # A_H, resident
                pl.BlockSpec((W, W), lambda i: (0, 0)),        # A_W, resident
                pl.BlockSpec((bt, H, W), lambda i: (i, 0, 0)),  # pred
                pl.BlockSpec((bt, H, W), lambda i: (i, 0, 0)),  # mask
            ],
            out_specs=pl.BlockSpec((bt, 8, 128), lambda i: (i, 0, 0)),
        ),
        compiler_params=pltpu.CompilerParams(
            dimension_semantics=("parallel",)),
    )(a_h, a_w, p, m)

    bce_sum = partials[:B, 0, 0]
    inter = partials[:B, 0, 1]
    union = partials[:B, 0, 2]

    # Legacy reduce='none' -> reduction='mean': wbce is the global mean BCE, and
    # (weit*wbce).sum/weit.sum reduces back to that scalar for every (n, c).
    wbce = jnp.sum(bce_sum) / float(B * H * W)
    wiou = 1.0 - (inter + 1.0) / (union - inter + 1.0)
    return wbce + jnp.mean(wiou)


def _ref_loss(pred, mask):
    # Independent plain-JAX reference (reduce_window pooling) for sanity.
    pooled = lax.reduce_window(
        mask, 0.0, lax.add,
        window_dimensions=(1, 1, _K, _K),
        window_strides=(1, 1, 1, 1),
        padding=((0, 0), (0, 0), (_PAD, _PAD), (_PAD, _PAD))) / _DIV
    weit = 1.0 + 5.0 * jnp.abs(pooled - mask)
    bce = (jnp.maximum(pred, 0.0) - pred * mask
           + jnp.log1p(jnp.exp(-jnp.abs(pred))))
    wbce = bce.mean()  # PyTorch legacy reduce='none' -> reduction='mean'
    wbce_nc = (weit * wbce).sum((2, 3)) / weit.sum((2, 3))
    sig = jax.nn.sigmoid(pred)
    inter = (sig * mask * weit).sum((2, 3))
    union = ((sig + mask) * weit).sum((2, 3))
    wiou = 1.0 - (inter + 1.0) / (union - inter + 1.0)
    return (wbce_nc + wiou).mean()


if __name__ == "__main__":
    key = jax.random.PRNGKey(0)
    k1, k2 = jax.random.split(key)
    N, C, H, W = 2, 4, 16, 16
    pred = jax.random.normal(k1, (N, C, H, W), dtype=jnp.float32)
    mask = (jax.random.uniform(k2, (N, C, H, W)) > 0.5).astype(jnp.float32)

    ref = _ref_loss(pred, mask)

    # Default batching (single grid step here).
    loss = jax.block_until_ready(structure_loss(pred, mask))
    assert jnp.allclose(loss, ref, rtol=1e-4, atol=1e-5), (loss, ref)

    # Exercise the multi-step grid + batch-padding path (bt does not divide B).
    loss2 = jax.block_until_ready(structure_loss(pred, mask, bt=3))
    assert jnp.allclose(loss2, ref, rtol=1e-4, atol=1e-5), (loss2, ref)

    print("KERNEL_OK")
</pallas_src>

<mosaic_0001>
module attributes {stable_mosaic.version = 11 : i64} {
  func.func @_structure_loss_kernel(%arg0: i32, %arg1: memref<16x16xbf16, #tpu.memory_space<vmem>>, %arg2: memref<16x16xbf16, #tpu.memory_space<vmem>>, %arg3: memref<8x16x16xf32, #tpu.memory_space<vmem>>, %arg4: memref<8x16x16xf32, #tpu.memory_space<vmem>>, %arg5: memref<8x8x128xf32, #tpu.memory_space<vmem>>) attributes {dimension_semantics = [#tpu.dimension_semantics<parallel>], iteration_bounds = array<i64: 1>, scalar_prefetch = 0 : i64, scratch_operands = 0 : i64, tpu.core_type = #tpu.core_type<tc>, window_params = [{pipeline_mode = #tpu.pipeline_mode<synchronous>, transform_indices = @transform_0, window_bounds = array<i64: 16, 16>}, {pipeline_mode = #tpu.pipeline_mode<synchronous>, transform_indices = @transform_1, window_bounds = array<i64: 16, 16>}, {transform_indices = @transform_2, window_bounds = array<i64: 8, 16, 16>}, {transform_indices = @transform_3, window_bounds = array<i64: 8, 16, 16>}, {transform_indices = @transform_4, window_bounds = array<i64: 8, 8, 128>}]} {
    %c0 = arith.constant 0 : index
    %c0_0 = arith.constant 0 : index
    %0 = vector.load %arg1[%c0, %c0_0] : memref<16x16xbf16, #tpu.memory_space<vmem>>, vector<16x16xbf16>
    %c0_1 = arith.constant 0 : index
    %c0_2 = arith.constant 0 : index
    %1 = vector.load %arg2[%c0_1, %c0_2] : memref<16x16xbf16, #tpu.memory_space<vmem>>, vector<16x16xbf16>
    %2 = tpu.iota {dimensions = array<i32: 1>} : vector<8x128xi32>
    %c0_i32 = arith.constant 0 : i32
    %3 = arith.index_cast %c0_i32 : i32 to index
    %c0_3 = arith.constant 0 : index
    %c0_4 = arith.constant 0 : index
    %4 = vector.load %arg3[%3, %c0_3, %c0_4] : memref<8x16x16xf32, #tpu.memory_space<vmem>>, vector<1x16x16xf32>
    %5 = vector.shape_cast %4 : vector<1x16x16xf32> to vector<16x16xf32>
    %6 = arith.index_cast %c0_i32 : i32 to index
    %c0_5 = arith.constant 0 : index
    %c0_6 = arith.constant 0 : index
    %7 = vector.load %arg4[%6, %c0_5, %c0_6] : memref<8x16x16xf32, #tpu.memory_space<vmem>>, vector<1x16x16xf32>
    %8 = vector.shape_cast %7 : vector<1x16x16xf32> to vector<16x16xf32>
    %9 = arith.truncf %8 : vector<16x16xf32> to vector<16x16xbf16>
    %cst = arith.constant dense<0.000000e+00> : vector<16x16xf32>
    %10 = tpu.matmul %0, %9, %cst {dimension_numbers = #tpu.dot_dimension_numbers<[1], [0], [0], [1], [0, 0, 1, 1], [], []>} : vector<16x16xbf16>, vector<16x16xbf16>, vector<16x16xf32> -> vector<16x16xf32>
    %11 = arith.truncf %10 : vector<16x16xf32> to vector<16x16xbf16>
    %cst_7 = arith.constant dense<0.000000e+00> : vector<16x16xf32>
    %12 = tpu.matmul %11, %1, %cst_7 {dimension_numbers = #tpu.dot_dimension_numbers<[1], [0], [0], [1], [0, 0, 1, 1], [], []>} : vector<16x16xbf16>, vector<16x16xbf16>, vector<16x16xf32> -> vector<16x16xf32>
    %cst_8 = arith.constant 0.00104058278 : f32
    %13 = vector.broadcast %cst_8 : f32 to vector<16x16xf32>
    %14 = arith.mulf %12, %13 : vector<16x16xf32>
    %15 = arith.subf %14, %8 : vector<16x16xf32>
    %16 = math.absf %15 : vector<16x16xf32>
    %cst_9 = arith.constant 5.000000e+00 : f32
    %17 = vector.broadcast %cst_9 : f32 to vector<16x16xf32>
    %18 = arith.mulf %17, %16 : vector<16x16xf32>
    %cst_10 = arith.constant 1.000000e+00 : f32
    %19 = vector.broadcast %cst_10 : f32 to vector<16x16xf32>
    %20 = arith.addf %19, %18 : vector<16x16xf32>
    %21 = math.absf %5 : vector<16x16xf32>
    %cst_11 = arith.constant 0.000000e+00 : f32
    %22 = vector.broadcast %cst_11 : f32 to vector<16x16xf32>
    %23 = arith.subf %22, %21 : vector<16x16xf32>
    %24 = math.exp %23 : vector<16x16xf32>
    %cst_12 = arith.constant 0.000000e+00 : f32
    %25 = vector.broadcast %cst_12 : f32 to vector<16x16xf32>
    %26 = arith.maximumf %5, %25 : vector<16x16xf32>
    %27 = arith.mulf %5, %8 : vector<16x16xf32>
    %28 = arith.subf %26, %27 : vector<16x16xf32>
    %cst_13 = arith.constant 1.000000e+00 : f32
    %29 = vector.broadcast %cst_13 : f32 to vector<16x16xf32>
    %30 = arith.addf %29, %24 : vector<16x16xf32>
    %31 = math.log %30 : vector<16x16xf32>
    %32 = arith.addf %28, %31 : vector<16x16xf32>
    %cst_14 = arith.constant 1.000000e+00 : f32
    %33 = vector.broadcast %cst_14 : f32 to vector<16x16xf32>
    %34 = arith.addf %33, %24 : vector<16x16xf32>
    %35 = tpu.reciprocal %34 : vector<16x16xf32> -> vector<16x16xf32>
    %cst_15 = arith.constant 0.000000e+00 : f32
    %36 = vector.broadcast %cst_15 : f32 to vector<16x16xf32>
    %37 = arith.cmpf oge, %5, %36 : vector<16x16xf32>
    %38 = arith.mulf %24, %35 : vector<16x16xf32>
    %39 = arith.select %37, %35, %38 : vector<16x16xi1>, vector<16x16xf32>
    %40 = vector.shape_cast %32 : vector<16x16xf32> to vector<1x16x16xf32>
    %cst_16 = arith.constant dense<0.000000e+00> : vector<1xf32>
    %41 = vector.multi_reduction <add>, %40, %cst_16 [1, 2] : vector<1x16x16xf32> to vector<1xf32>
    %42 = vector.shape_cast %41 : vector<1xf32> to vector<1x1x1xf32>
    %43 = vector.extract %42[0, 0, 0] : f32 from vector<1x1x1xf32>
    %44 = vector.broadcast %43 : f32 to vector<1x1xf32>
    %45 = arith.mulf %39, %8 : vector<16x16xf32>
    %46 = arith.mulf %45, %20 : vector<16x16xf32>
    %47 = vector.shape_cast %46 : vector<16x16xf32> to vector<1x16x16xf32>
    %cst_17 = arith.constant dense<0.000000e+00> : vector<1xf32>
    %48 = vector.multi_reduction <add>, %47, %cst_17 [1, 2] : vector<1x16x16xf32> to vector<1xf32>
    %49 = vector.shape_cast %48 : vector<1xf32> to vector<1x1x1xf32>
    %50 = vector.extract %49[0, 0, 0] : f32 from vector<1x1x1xf32>
    %51 = vector.broadcast %50 : f32 to vector<1x1xf32>
    %52 = arith.addf %39, %8 : vector<16x16xf32>
    %53 = arith.mulf %52, %20 : vector<16x16xf32>
    %54 = vector.shape_cast %53 : vector<16x16xf32> to vector<1x16x16xf32>
    %cst_18 = arith.constant dense<0.000000e+00> : vector<1xf32>
    %55 = vector.multi_reduction <add>, %54, %cst_18 [1, 2] : vector<1x16x16xf32> to vector<1xf32>
    %56 = vector.shape_cast %55 : vector<1xf32> to vector<1x1x1xf32>
    %57 = vector.extract %56[0, 0, 0] : f32 from vector<1x1x1xf32>
    %58 = vector.broadcast %57 : f32 to vector<1x1xf32>
    %c0_i32_19 = arith.constant 0 : i32
    %59 = vector.broadcast %c0_i32_19 : i32 to vector<8x128xi32>
    %60 = arith.cmpi eq, %2, %59 : vector<8x128xi32>
    %c1_i32 = arith.constant 1 : i32
    %61 = vector.broadcast %c1_i32 : i32 to vector<8x128xi32>
    %62 = arith.cmpi eq, %2, %61 : vector<8x128xi32>
    %c2_i32 = arith.constant 2 : i32
    %63 = vector.broadcast %c2_i32 : i32 to vector<8x128xi32>
    %64 = arith.cmpi eq, %2, %63 : vector<8x128xi32>
    %cst_20 = arith.constant 0.000000e+00 : f32
    %65 = vector.shape_cast %58 : vector<1x1xf32> to vector<1x1xf32>
    %66 = vector.broadcast %65 : vector<1x1xf32> to vector<8x128xf32>
    %67 = vector.broadcast %cst_20 : f32 to vector<8x128xf32>
    %68 = arith.select %64, %66, %67 : vector<8x128xi1>, vector<8x128xf32>
    %69 = vector.shape_cast %51 : vector<1x1xf32> to vector<1x1xf32>
    %70 = vector.broadcast %69 : vector<1x1xf32> to vector<8x128xf32>
    %71 = arith.select %62, %70, %68 : vector<8x128xi1>, vector<8x128xf32>
    %72 = vector.shape_cast %44 : vector<1x1xf32> to vector<1x1xf32>
    %73 = vector.broadcast %72 : vector<1x1xf32> to vector<8x128xf32>
    %74 = arith.select %60, %73, %71 : vector<8x128xi1>, vector<8x128xf32>
    %75 = arith.index_cast %c0_i32 : i32 to index
    %c0_21 = arith.constant 0 : index
    %c0_22 = arith.constant 0 : index
    %76 = vector.load %arg5[%75, %c0_21, %c0_22] : memref<8x8x128xf32, #tpu.memory_space<vmem>>, vector<1x8x128xf32>
    %77 = vector.shape_cast %76 : vector<1x8x128xf32> to vector<8x128xf32>
    %78 = vector.shape_cast %74 : vector<8x128xf32> to vector<1x8x128xf32>
    tpu.vector_store %arg5[%75, %c0_21, %c0_22], %78 {strides = array<i32>} : memref<8x8x128xf32, #tpu.memory_space<vmem>>, vector<1x8x128xf32>,
    %c1_i32_23 = arith.constant 1 : i32
    %79 = arith.index_cast %c1_i32_23 : i32 to index
    %c0_24 = arith.constant 0 : index
    %c0_25 = arith.constant 0 : index
    %80 = vector.load %arg3[%79, %c0_24, %c0_25] : memref<8x16x16xf32, #tpu.memory_space<vmem>>, vector<1x16x16xf32>
    %81 = vector.shape_cast %80 : vector<1x16x16xf32> to vector<16x16xf32>
    %82 = arith.index_cast %c1_i32_23 : i32 to index
    %c0_26 = arith.constant 0 : index
    %c0_27 = arith.constant 0 : index
    %83 = vector.load %arg4[%82, %c0_26, %c0_27] : memref<8x16x16xf32, #tpu.memory_space<vmem>>, vector<1x16x16xf32>
    %84 = vector.shape_cast %83 : vector<1x16x16xf32> to vector<16x16xf32>
    %85 = arith.truncf %84 : vector<16x16xf32> to vector<16x16xbf16>
    %cst_28 = arith.constant dense<0.000000e+00> : vector<16x16xf32>
    %86 = tpu.matmul %0, %85, %cst_28 {dimension_numbers = #tpu.dot_dimension_numbers<[1], [0], [0], [1], [0, 0, 1, 1], [], []>} : vector<16x16xbf16>, vector<16x16xbf16>, vector<16x16xf32> -> vector<16x16xf32>
    %87 = arith.truncf %86 : vector<16x16xf32> to vector<16x16xbf16>
    %cst_29 = arith.constant dense<0.000000e+00> : vector<16x16xf32>
    %88 = tpu.matmul %87, %1, %cst_29 {dimension_numbers = #tpu.dot_dimension_numbers<[1], [0], [0], [1], [0, 0, 1, 1], [], []>} : vector<16x16xbf16>, vector<16x16xbf16>, vector<16x16xf32> -> vector<16x16xf32>
    %cst_30 = arith.constant 0.00104058278 : f32
    %89 = vector.broadcast %cst_30 : f32 to vector<16x16xf32>
    %90 = arith.mulf %88, %89 : vector<16x16xf32>
    %91 = arith.subf %90, %84 : vector<16x16xf32>
    %92 = math.absf %91 : vector<16x16xf32>
    %cst_31 = arith.constant 5.000000e+00 : f32
    %93 = vector.broadcast %cst_31 : f32 to vector<16x16xf32>
    %94 = arith.mulf %93, %92 : vector<16x16xf32>
    %cst_32 = arith.constant 1.000000e+00 : f32
    %95 = vector.broadcast %cst_32 : f32 to vector<16x16xf32>
    %96 = arith.addf %95, %94 : vector<16x16xf32>
    %97 = math.absf %81 : vector<16x16xf32>
    %cst_33 = arith.constant 0.000000e+00 : f32
    %98 = vector.broadcast %cst_33 : f32 to vector<16x16xf32>
    %99 = arith.subf %98, %97 : vector<16x16xf32>
    %100 = math.exp %99 : vector<16x16xf32>
    %cst_34 = arith.constant 0.000000e+00 : f32
    %101 = vector.broadcast %cst_34 : f32 to vector<16x16xf32>
    %102 = arith.maximumf %81, %101 : vector<16x16xf32>
    %103 = arith.mulf %81, %84 : vector<16x16xf32>
    %104 = arith.subf %102, %103 : vector<16x16xf32>
    %cst_35 = arith.constant 1.000000e+00 : f32
    %105 = vector.broadcast %cst_35 : f32 to vector<16x16xf32>
    %106 = arith.addf %105, %100 : vector<16x16xf32>
    %107 = math.log %106 : vector<16x16xf32>
    %108 = arith.addf %104, %107 : vector<16x16xf32>
    %cst_36 = arith.constant 1.000000e+00 : f32
    %109 = vector.broadcast %cst_36 : f32 to vector<16x16xf32>
    %110 = arith.addf %109, %100 : vector<16x16xf32>
    %111 = tpu.reciprocal %110 : vector<16x16xf32> -> vector<16x16xf32>
    %cst_37 = arith.constant 0.000000e+00 : f32
    %112 = vector.broadcast %cst_37 : f32 to vector<16x16xf32>
    %113 = arith.cmpf oge, %81, %112 : vector<16x16xf32>
    %114 = arith.mulf %100, %111 : vector<16x16xf32>
    %115 = arith.select %113, %111, %114 : vector<16x16xi1>, vector<16x16xf32>
    %116 = vector.shape_cast %108 : vector<16x16xf32> to vector<1x16x16xf32>
    %cst_38 = arith.constant dense<0.000000e+00> : vector<1xf32>
    %117 = vector.multi_reduction <add>, %116, %cst_38 [1, 2] : vector<1x16x16xf32> to vector<1xf32>
    %118 = vector.shape_cast %117 : vector<1xf32> to vector<1x1x1xf32>
    %119 = vector.extract %118[0, 0, 0] : f32 from vector<1x1x1xf32>
    %120 = vector.broadcast %119 : f32 to vector<1x1xf32>
    %121 = arith.mulf %115, %84 : vector<16x16xf32>
    %122 = arith.mulf %121, %96 : vector<16x16xf32>
    %123 = vector.shape_cast %122 : vector<16x16xf32> to vector<1x16x16xf32>
    %cst_39 = arith.constant dense<0.000000e+00> : vector<1xf32>
    %124 = vector.multi_reduction <add>, %123, %cst_39 [1, 2] : vector<1x16x16xf32> to vector<1xf32>
    %125 = vector.shape_cast %124 : vector<1xf32> to vector<1x1x1xf32>
    %126 = vector.extract %125[0, 0, 0] : f32 from vector<1x1x1xf32>
    %127 = vector.broadcast %126 : f32 to vector<1x1xf32>
    %128 = arith.addf %115, %84 : vector<16x16xf32>
    %129 = arith.mulf %128, %96 : vector<16x16xf32>
    %130 = vector.shape_cast %129 : vector<16x16xf32> to vector<1x16x16xf32>
    %cst_40 = arith.constant dense<0.000000e+00> : vector<1xf32>
    %131 = vector.multi_reduction <add>, %130, %cst_40 [1, 2] : vector<1x16x16xf32> to vector<1xf32>
    %132 = vector.shape_cast %131 : vector<1xf32> to vector<1x1x1xf32>
    %133 = vector.extract %132[0, 0, 0] : f32 from vector<1x1x1xf32>
    %134 = vector.broadcast %133 : f32 to vector<1x1xf32>
    %c0_i32_41 = arith.constant 0 : i32
    %135 = vector.broadcast %c0_i32_41 : i32 to vector<8x128xi32>
    %136 = arith.cmpi eq, %2, %135 : vector<8x128xi32>
    %c1_i32_42 = arith.constant 1 : i32
    %137 = vector.broadcast %c1_i32_42 : i32 to vector<8x128xi32>
    %138 = arith.cmpi eq, %2, %137 : vector<8x128xi32>
    %c2_i32_43 = arith.constant 2 : i32
    %139 = vector.broadcast %c2_i32_43 : i32 to vector<8x128xi32>
    %140 = arith.cmpi eq, %2, %139 : vector<8x128xi32>
    %cst_44 = arith.constant 0.000000e+00 : f32
    %141 = vector.shape_cast %134 : vector<1x1xf32> to vector<1x1xf32>
    %142 = vector.broadcast %141 : vector<1x1xf32> to vector<8x128xf32>
    %143 = vector.broadcast %cst_44 : f32 to vector<8x128xf32>
    %144 = arith.select %140, %142, %143 : vector<8x128xi1>, vector<8x128xf32>
    %145 = vector.shape_cast %127 : vector<1x1xf32> to vector<1x1xf32>
    %146 = vector.broadcast %145 : vector<1x1xf32> to vector<8x128xf32>
    %147 = arith.select %138, %146, %144 : vector<8x128xi1>, vector<8x128xf32>
    %148 = vector.shape_cast %120 : vector<1x1xf32> to vector<1x1xf32>
    %149 = vector.broadcast %148 : vector<1x1xf32> to vector<8x128xf32>
    %150 = arith.select %136, %149, %147 : vector<8x128xi1>, vector<8x128xf32>
    %151 = arith.index_cast %c1_i32_23 : i32 to index
    %c0_45 = arith.constant 0 : index
    %c0_46 = arith.constant 0 : index
    %152 = vector.load %arg5[%151, %c0_45, %c0_46] : memref<8x8x128xf32, #tpu.memory_space<vmem>>, vector<1x8x128xf32>
    %153 = vector.shape_cast %152 : vector<1x8x128xf32> to vector<8x128xf32>
    %154 = vector.shape_cast %150 : vector<8x128xf32> to vector<1x8x128xf32>
    tpu.vector_store %arg5[%151, %c0_45, %c0_46], %154 {strides = array<i32>} : memref<8x8x128xf32, #tpu.memory_space<vmem>>, vector<1x8x128xf32>,
    %c2_i32_47 = arith.constant 2 : i32
    %155 = arith.index_cast %c2_i32_47 : i32 to index
    %c0_48 = arith.constant 0 : index
    %c0_49 = arith.constant 0 : index
    %156 = vector.load %arg3[%155, %c0_48, %c0_49] : memref<8x16x16xf32, #tpu.memory_space<vmem>>, vector<1x16x16xf32>
    %157 = vector.shape_cast %156 : vector<1x16x16xf32> to vector<16x16xf32>
    %158 = arith.index_cast %c2_i32_47 : i32 to index
    %c0_50 = arith.constant 0 : index
    %c0_51 = arith.constant 0 : index
    %159 = vector.load %arg4[%158, %c0_50, %c0_51] : memref<8x16x16xf32, #tpu.memory_space<vmem>>, vector<1x16x16xf32>
    %160 = vector.shape_cast %159 : vector<1x16x16xf32> to vector<16x16xf32>
    %161 = arith.truncf %160 : vector<16x16xf32> to vector<16x16xbf16>
    %cst_52 = arith.constant dense<0.000000e+00> : vector<16x16xf32>
    %162 = tpu.matmul %0, %161, %cst_52 {dimension_numbers = #tpu.dot_dimension_numbers<[1], [0], [0], [1], [0, 0, 1, 1], [], []>} : vector<16x16xbf16>, vector<16x16xbf16>, vector<16x16xf32> -> vector<16x16xf32>
    %163 = arith.truncf %162 : vector<16x16xf32> to vector<16x16xbf16>
    %cst_53 = arith.constant dense<0.000000e+00> : vector<16x16xf32>
    %164 = tpu.matmul %163, %1, %cst_53 {dimension_numbers = #tpu.dot_dimension_numbers<[1], [0], [0], [1], [0, 0, 1, 1], [], []>} : vector<16x16xbf16>, vector<16x16xbf16>, vector<16x16xf32> -> vector<16x16xf32>
    %cst_54 = arith.constant 0.00104058278 : f32
    %165 = vector.broadcast %cst_54 : f32 to vector<16x16xf32>
    %166 = arith.mulf %164, %165 : vector<16x16xf32>
    %167 = arith.subf %166, %160 : vector<16x16xf32>
    %168 = math.absf %167 : vector<16x16xf32>
    %cst_55 = arith.constant 5.000000e+00 : f32
    %169 = vector.broadcast %cst_55 : f32 to vector<16x16xf32>
    %170 = arith.mulf %169, %168 : vector<16x16xf32>
    %cst_56 = arith.constant 1.000000e+00 : f32
    %171 = vector.broadcast %cst_56 : f32 to vector<16x16xf32>
    %172 = arith.addf %171, %170 : vector<16x16xf32>
    %173 = math.absf %157 : vector<16x16xf32>
    %cst_57 = arith.constant 0.000000e+00 : f32
    %174 = vector.broadcast %cst_57 : f32 to vector<16x16xf32>
    %175 = arith.subf %174, %173 : vector<16x16xf32>
    %176 = math.exp %175 : vector<16x16xf32>
    %cst_58 = arith.constant 0.000000e+00 : f32
    %177 = vector.broadcast %cst_58 : f32 to vector<16x16xf32>
    %178 = arith.maximumf %157, %177 : vector<16x16xf32>
    %179 = arith.mulf %157, %160 : vector<16x16xf32>
    %180 = arith.subf %178, %179 : vector<16x16xf32>
    %cst_59 = arith.constant 1.000000e+00 : f32
    %181 = vector.broadcast %cst_59 : f32 to vector<16x16xf32>
    %182 = arith.addf %181, %176 : vector<16x16xf32>
    %183 = math.log %182 : vector<16x16xf32>
    %184 = arith.addf %180, %183 : vector<16x16xf32>
    %cst_60 = arith.constant 1.000000e+00 : f32
    %185 = vector.broadcast %cst_60 : f32 to vector<16x16xf32>
    %186 = arith.addf %185, %176 : vector<16x16xf32>
    %187 = tpu.reciprocal %186 : vector<16x16xf32> -> vector<16x16xf32>
    %cst_61 = arith.constant 0.000000e+00 : f32
    %188 = vector.broadcast %cst_61 : f32 to vector<16x16xf32>
    %189 = arith.cmpf oge, %157, %188 : vector<16x16xf32>
    %190 = arith.mulf %176, %187 : vector<16x16xf32>
    %191 = arith.select %189, %187, %190 : vector<16x16xi1>, vector<16x16xf32>
    %192 = vector.shape_cast %184 : vector<16x16xf32> to vector<1x16x16xf32>
    %cst_62 = arith.constant dense<0.000000e+00> : vector<1xf32>
    %193 = vector.multi_reduction <add>, %192, %cst_62 [1, 2] : vector<1x16x16xf32> to vector<1xf32>
    %194 = vector.shape_cast %193 : vector<1xf32> to vector<1x1x1xf32>
    %195 = vector.extract %194[0, 0, 0] : f32 from vector<1x1x1xf32>
    %196 = vector.broadcast %195 : f32 to vector<1x1xf32>
    %197 = arith.mulf %191, %160 : vector<16x16xf32>
    %198 = arith.mulf %197, %172 : vector<16x16xf32>
    %199 = vector.shape_cast %198 : vector<16x16xf32> to vector<1x16x16xf32>
    %cst_63 = arith.constant dense<0.000000e+00> : vector<1xf32>
    %200 = vector.multi_reduction <add>, %199, %cst_63 [1, 2] : vector<1x16x16xf32> to vector<1xf32>
    %201 = vector.shape_cast %200 : vector<1xf32> to vector<1x1x1xf32>
    %202 = vector.extract %201[0, 0, 0] : f32 from vector<1x1x1xf32>
    %203 = vector.broadcast %202 : f32 to vector<1x1xf32>
    %204 = arith.addf %191, %160 : vector<16x16xf32>
    %205 = arith.mulf %204, %172 : vector<16x16xf32>
    %206 = vector.shape_cast %205 : vector<16x16xf32> to vector<1x16x16xf32>
    %cst_64 = arith.constant dense<0.000000e+00> : vector<1xf32>
    %207 = vector.multi_reduction <add>, %206, %cst_64 [1, 2] : vector<1x16x16xf32> to vector<1xf32>
    %208 = vector.shape_cast %207 : vector<1xf32> to vector<1x1x1xf32>
    %209 = vector.extract %208[0, 0, 0] : f32 from vector<1x1x1xf32>
    %210 = vector.broadcast %209 : f32 to vector<1x1xf32>
    %c0_i32_65 = arith.constant 0 : i32
    %211 = vector.broadcast %c0_i32_65 : i32 to vector<8x128xi32>
    %212 = arith.cmpi eq, %2, %211 : vector<8x128xi32>
    %c1_i32_66 = arith.constant 1 : i32
    %213 = vector.broadcast %c1_i32_66 : i32 to vector<8x128xi32>
    %214 = arith.cmpi eq, %2, %213 : vector<8x128xi32>
    %c2_i32_67 = arith.constant 2 : i32
    %215 = vector.broadcast %c2_i32_67 : i32 to vector<8x128xi32>
    %216 = arith.cmpi eq, %2, %215 : vector<8x128xi32>
    %cst_68 = arith.constant 0.000000e+00 : f32
    %217 = vector.shape_cast %210 : vector<1x1xf32> to vector<1x1xf32>
    %218 = vector.broadcast %217 : vector<1x1xf32> to vector<8x128xf32>
    %219 = vector.broadcast %cst_68 : f32 to vector<8x128xf32>
    %220 = arith.select %216, %218, %219 : vector<8x128xi1>, vector<8x128xf32>
    %221 = vector.shape_cast %203 : vector<1x1xf32> to vector<1x1xf32>
    %222 = vector.broadcast %221 : vector<1x1xf32> to vector<8x128xf32>
    %223 = arith.select %214, %222, %220 : vector<8x128xi1>, vector<8x128xf32>
    %224 = vector.shape_cast %196 : vector<1x1xf32> to vector<1x1xf32>
    %225 = vector.broadcast %224 : vector<1x1xf32> to vector<8x128xf32>
    %226 = arith.select %212, %225, %223 : vector<8x128xi1>, vector<8x128xf32>
    %227 = arith.index_cast %c2_i32_47 : i32 to index
    %c0_69 = arith.constant 0 : index
    %c0_70 = arith.constant 0 : index
    %228 = vector.load %arg5[%227, %c0_69, %c0_70] : memref<8x8x128xf32, #tpu.memory_space<vmem>>, vector<1x8x128xf32>
    %229 = vector.shape_cast %228 : vector<1x8x128xf32> to vector<8x128xf32>
    %230 = vector.shape_cast %226 : vector<8x128xf32> to vector<1x8x128xf32>
    tpu.vector_store %arg5[%227, %c0_69, %c0_70], %230 {strides = array<i32>} : memref<8x8x128xf32, #tpu.memory_space<vmem>>, vector<1x8x128xf32>,
    %c3_i32 = arith.constant 3 : i32
    %231 = arith.index_cast %c3_i32 : i32 to index
    %c0_71 = arith.constant 0 : index
    %c0_72 = arith.constant 0 : index
    %232 = vector.load %arg3[%231, %c0_71, %c0_72] : memref<8x16x16xf32, #tpu.memory_space<vmem>>, vector<1x16x16xf32>
    %233 = vector.shape_cast %232 : vector<1x16x16xf32> to vector<16x16xf32>
    %234 = arith.index_cast %c3_i32 : i32 to index
    %c0_73 = arith.constant 0 : index
    %c0_74 = arith.constant 0 : index
    %235 = vector.load %arg4[%234, %c0_73, %c0_74] : memref<8x16x16xf32, #tpu.memory_space<vmem>>, vector<1x16x16xf32>
    %236 = vector.shape_cast %235 : vector<1x16x16xf32> to vector<16x16xf32>
    %237 = arith.truncf %236 : vector<16x16xf32> to vector<16x16xbf16>
    %cst_75 = arith.constant dense<0.000000e+00> : vector<16x16xf32>
    %238 = tpu.matmul %0, %237, %cst_75 {dimension_numbers = #tpu.dot_dimension_numbers<[1], [0], [0], [1], [0, 0, 1, 1], [], []>} : vector<16x16xbf16>, vector<16x16xbf16>, vector<16x16xf32> -> vector<16x16xf32>
    %239 = arith.truncf %238 : vector<16x16xf32> to vector<16x16xbf16>
    %cst_76 = arith.constant dense<0.000000e+00> : vector<16x16xf32>
    %240 = tpu.matmul %239, %1, %cst_76 {dimension_numbers = #tpu.dot_dimension_numbers<[1], [0], [0], [1], [0, 0, 1, 1], [], []>} : vector<16x16xbf16>, vector<16x16xbf16>, vector<16x16xf32> -> vector<16x16xf32>
    %cst_77 = arith.constant 0.00104058278 : f32
    %241 = vector.broadcast %cst_77 : f32 to vector<16x16xf32>
    %242 = arith.mulf %240, %241 : vector<16x16xf32>
    %243 = arith.subf %242, %236 : vector<16x16xf32>
    %244 = math.absf %243 : vector<16x16xf32>
    %cst_78 = arith.constant 5.000000e+00 : f32
    %245 = vector.broadcast %cst_78 : f32 to vector<16x16xf32>
    %246 = arith.mulf %245, %244 : vector<16x16xf32>
    %cst_79 = arith.constant 1.000000e+00 : f32
    %247 = vector.broadcast %cst_79 : f32 to vector<16x16xf32>
    %248 = arith.addf %247, %246 : vector<16x16xf32>
    %249 = math.absf %233 : vector<16x16xf32>
    %cst_80 = arith.constant 0.000000e+00 : f32
    %250 = vector.broadcast %cst_80 : f32 to vector<16x16xf32>
    %251 = arith.subf %250, %249 : vector<16x16xf32>
    %252 = math.exp %251 : vector<16x16xf32>
    %cst_81 = arith.constant 0.000000e+00 : f32
    %253 = vector.broadcast %cst_81 : f32 to vector<16x16xf32>
    %254 = arith.maximumf %233, %253 : vector<16x16xf32>
    %255 = arith.mulf %233, %236 : vector<16x16xf32>
    %256 = arith.subf %254, %255 : vector<16x16xf32>
    %cst_82 = arith.constant 1.000000e+00 : f32
    %257 = vector.broadcast %cst_82 : f32 to vector<16x16xf32>
    %258 = arith.addf %257, %252 : vector<16x16xf32>
    %259 = math.log %258 : vector<16x16xf32>
    %260 = arith.addf %256, %259 : vector<16x16xf32>
    %cst_83 = arith.constant 1.000000e+00 : f32
    %261 = vector.broadcast %cst_83 : f32 to vector<16x16xf32>
    %262 = arith.addf %261, %252 : vector<16x16xf32>
    %263 = tpu.reciprocal %262 : vector<16x16xf32> -> vector<16x16xf32>
    %cst_84 = arith.constant 0.000000e+00 : f32
    %264 = vector.broadcast %cst_84 : f32 to vector<16x16xf32>
    %265 = arith.cmpf oge, %233, %264 : vector<16x16xf32>
    %266 = arith.mulf %252, %263 : vector<16x16xf32>
    %267 = arith.select %265, %263, %266 : vector<16x16xi1>, vector<16x16xf32>
    %268 = vector.shape_cast %260 : vector<16x16xf32> to vector<1x16x16xf32>
    %cst_85 = arith.constant dense<0.000000e+00> : vector<1xf32>
    %269 = vector.multi_reduction <add>, %268, %cst_85 [1, 2] : vector<1x16x16xf32> to vector<1xf32>
    %270 = vector.shape_cast %269 : vector<1xf32> to vector<1x1x1xf32>
    %271 = vector.extract %270[0, 0, 0] : f32 from vector<1x1x1xf32>
    %272 = vector.broadcast %271 : f32 to vector<1x1xf32>
    %273 = arith.mulf %267, %236 : vector<16x16xf32>
    %274 = arith.mulf %273, %248 : vector<16x16xf32>
    %275 = vector.shape_cast %274 : vector<16x16xf32> to vector<1x16x16xf32>
    %cst_86 = arith.constant dense<0.000000e+00> : vector<1xf32>
    %276 = vector.multi_reduction <add>, %275, %cst_86 [1, 2] : vector<1x16x16xf32> to vector<1xf32>
    %277 = vector.shape_cast %276 : vector<1xf32> to vector<1x1x1xf32>
    %278 = vector.extract %277[0, 0, 0] : f32 from vector<1x1x1xf32>
    %279 = vector.broadcast %278 : f32 to vector<1x1xf32>
    %280 = arith.addf %267, %236 : vector<16x16xf32>
    %281 = arith.mulf %280, %248 : vector<16x16xf32>
    %282 = vector.shape_cast %281 : vector<16x16xf32> to vector<1x16x16xf32>
    %cst_87 = arith.constant dense<0.000000e+00> : vector<1xf32>
    %283 = vector.multi_reduction <add>, %282, %cst_87 [1, 2] : vector<1x16x16xf32> to vector<1xf32>
    %284 = vector.shape_cast %283 : vector<1xf32> to vector<1x1x1xf32>
    %285 = vector.extract %284[0, 0, 0] : f32 from vector<1x1x1xf32>
    %286 = vector.broadcast %285 : f32 to vector<1x1xf32>
    %c0_i32_88 = arith.constant 0 : i32
    %287 = vector.broadcast %c0_i32_88 : i32 to vector<8x128xi32>
    %288 = arith.cmpi eq, %2, %287 : vector<8x128xi32>
    %c1_i32_89 = arith.constant 1 : i32
    %289 = vector.broadcast %c1_i32_89 : i32 to vector<8x128xi32>
    %290 = arith.cmpi eq, %2, %289 : vector<8x128xi32>
    %c2_i32_90 = arith.constant 2 : i32
    %291 = vector.broadcast %c2_i32_90 : i32 to vector<8x128xi32>
    %292 = arith.cmpi eq, %2, %291 : vector<8x128xi32>
    %cst_91 = arith.constant 0.000000e+00 : f32
    %293 = vector.shape_cast %286 : vector<1x1xf32> to vector<1x1xf32>
    %294 = vector.broadcast %293 : vector<1x1xf32> to vector<8x128xf32>
    %295 = vector.broadcast %cst_91 : f32 to vector<8x128xf32>
    %296 = arith.select %292, %294, %295 : vector<8x128xi1>, vector<8x128xf32>
    %297 = vector.shape_cast %279 : vector<1x1xf32> to vector<1x1xf32>
    %298 = vector.broadcast %297 : vector<1x1xf32> to vector<8x128xf32>
    %299 = arith.select %290, %298, %296 : vector<8x128xi1>, vector<8x128xf32>
    %300 = vector.shape_cast %272 : vector<1x1xf32> to vector<1x1xf32>
    %301 = vector.broadcast %300 : vector<1x1xf32> to vector<8x128xf32>
    %302 = arith.select %288, %301, %299 : vector<8x128xi1>, vector<8x128xf32>
    %303 = arith.index_cast %c3_i32 : i32 to index
    %c0_92 = arith.constant 0 : index
    %c0_93 = arith.constant 0 : index
    %304 = vector.load %arg5[%303, %c0_92, %c0_93] : memref<8x8x128xf32, #tpu.memory_space<vmem>>, vector<1x8x128xf32>
    %305 = vector.shape_cast %304 : vector<1x8x128xf32> to vector<8x128xf32>
    %306 = vector.shape_cast %302 : vector<8x128xf32> to vector<1x8x128xf32>
    tpu.vector_store %arg5[%303, %c0_92, %c0_93], %306 {strides = array<i32>} : memref<8x8x128xf32, #tpu.memory_space<vmem>>, vector<1x8x128xf32>,
    %c4_i32 = arith.constant 4 : i32
    %307 = arith.index_cast %c4_i32 : i32 to index
    %c0_94 = arith.constant 0 : index
    %c0_95 = arith.constant 0 : index
    %308 = vector.load %arg3[%307, %c0_94, %c0_95] : memref<8x16x16xf32, #tpu.memory_space<vmem>>, vector<1x16x16xf32>
    %309 = vector.shape_cast %308 : vector<1x16x16xf32> to vector<16x16xf32>
    %310 = arith.index_cast %c4_i32 : i32 to index
    %c0_96 = arith.constant 0 : index
    %c0_97 = arith.constant 0 : index
    %311 = vector.load %arg4[%310, %c0_96, %c0_97] : memref<8x16x16xf32, #tpu.memory_space<vmem>>, vector<1x16x16xf32>
    %312 = vector.shape_cast %311 : vector<1x16x16xf32> to vector<16x16xf32>
    %313 = arith.truncf %312 : vector<16x16xf32> to vector<16x16xbf16>
    %cst_98 = arith.constant dense<0.000000e+00> : vector<16x16xf32>
    %314 = tpu.matmul %0, %313, %cst_98 {dimension_numbers = #tpu.dot_dimension_numbers<[1], [0], [0], [1], [0, 0, 1, 1], [], []>} : vector<16x16xbf16>, vector<16x16xbf16>, vector<16x16xf32> -> vector<16x16xf32>
    %315 = arith.truncf %314 : vector<16x16xf32> to vector<16x16xbf16>
    %cst_99 = arith.constant dense<0.000000e+00> : vector<16x16xf32>
    %316 = tpu.matmul %315, %1, %cst_99 {dimension_numbers = #tpu.dot_dimension_numbers<[1], [0], [0], [1], [0, 0, 1, 1], [], []>} : vector<16x16xbf16>, vector<16x16xbf16>, vector<16x16xf32> -> vector<16x16xf32>
    %cst_100 = arith.constant 0.00104058278 : f32
    %317 = vector.broadcast %cst_100 : f32 to vector<16x16xf32>
    %318 = arith.mulf %316, %317 : vector<16x16xf32>
    %319 = arith.subf %318, %312 : vector<16x16xf32>
    %320 = math.absf %319 : vector<16x16xf32>
    %cst_101 = arith.constant 5.000000e+00 : f32
    %321 = vector.broadcast %cst_101 : f32 to vector<16x16xf32>
    %322 = arith.mulf %321, %320 : vector<16x16xf32>
    %cst_102 = arith.constant 1.000000e+00 : f32
    %323 = vector.broadcast %cst_102 : f32 to vector<16x16xf32>
    %324 = arith.addf %323, %322 : vector<16x16xf32>
    %325 = math.absf %309 : vector<16x16xf32>
    %cst_103 = arith.constant 0.000000e+00 : f32
    %326 = vector.broadcast %cst_103 : f32 to vector<16x16xf32>
    %327 = arith.subf %326, %325 : vector<16x16xf32>
    %328 = math.exp %327 : vector<16x16xf32>
    %cst_104 = arith.constant 0.000000e+00 : f32
    %329 = vector.broadcast %cst_104 : f32 to vector<16x16xf32>
    %330 = arith.maximumf %309, %329 : vector<16x16xf32>
    %331 = arith.mulf %309, %312 : vector<16x16xf32>
    %332 = arith.subf %330, %331 : vector<16x16xf32>
    %cst_105 = arith.constant 1.000000e+00 : f32
    %333 = vector.broadcast %cst_105 : f32 to vector<16x16xf32>
    %334 = arith.addf %333, %328 : vector<16x16xf32>
    %335 = math.log %334 : vector<16x16xf32>
    %336 = arith.addf %332, %335 : vector<16x16xf32>
    %cst_106 = arith.constant 1.000000e+00 : f32
    %337 = vector.broadcast %cst_106 : f32 to vector<16x16xf32>
    %338 = arith.addf %337, %328 : vector<16x16xf32>
    %339 = tpu.reciprocal %338 : vector<16x16xf32> -> vector<16x16xf32>
    %cst_107 = arith.constant 0.000000e+00 : f32
    %340 = vector.broadcast %cst_107 : f32 to vector<16x16xf32>
    %341 = arith.cmpf oge, %309, %340 : vector<16x16xf32>
    %342 = arith.mulf %328, %339 : vector<16x16xf32>
    %343 = arith.select %341, %339, %342 : vector<16x16xi1>, vector<16x16xf32>
    %344 = vector.shape_cast %336 : vector<16x16xf32> to vector<1x16x16xf32>
    %cst_108 = arith.constant dense<0.000000e+00> : vector<1xf32>
    %345 = vector.multi_reduction <add>, %344, %cst_108 [1, 2] : vector<1x16x16xf32> to vector<1xf32>
    %346 = vector.shape_cast %345 : vector<1xf32> to vector<1x1x1xf32>
    %347 = vector.extract %346[0, 0, 0] : f32 from vector<1x1x1xf32>
    %348 = vector.broadcast %347 : f32 to vector<1x1xf32>
    %349 = arith.mulf %343, %312 : vector<16x16xf32>
    %350 = arith.mulf %349, %324 : vector<16x16xf32>
    %351 = vector.shape_cast %350 : vector<16x16xf32> to vector<1x16x16xf32>
    %cst_109 = arith.constant dense<0.000000e+00> : vector<1xf32>
    %352 = vector.multi_reduction <add>, %351, %cst_109 [1, 2] : vector<1x16x16xf32> to vector<1xf32>
    %353 = vector.shape_cast %352 : vector<1xf32> to vector<1x1x1xf32>
    %354 = vector.extract %353[0, 0, 0] : f32 from vector<1x1x1xf32>
    %355 = vector.broadcast %354 : f32 to vector<1x1xf32>
    %356 = arith.addf %343, %312 : vector<16x16xf32>
    %357 = arith.mulf %356, %324 : vector<16x16xf32>
    %358 = vector.shape_cast %357 : vector<16x16xf32> to vector<1x16x16xf32>
    %cst_110 = arith.constant dense<0.000000e+00> : vector<1xf32>
    %359 = vector.multi_reduction <add>, %358, %cst_110 [1, 2] : vector<1x16x16xf32> to vector<1xf32>
    %360 = vector.shape_cast %359 : vector<1xf32> to vector<1x1x1xf32>
    %361 = vector.extract %360[0, 0, 0] : f32 from vector<1x1x1xf32>
    %362 = vector.broadcast %361 : f32 to vector<1x1xf32>
    %c0_i32_111 = arith.constant 0 : i32
    %363 = vector.broadcast %c0_i32_111 : i32 to vector<8x128xi32>
    %364 = arith.cmpi eq, %2, %363 : vector<8x128xi32>
    %c1_i32_112 = arith.constant 1 : i32
    %365 = vector.broadcast %c1_i32_112 : i32 to vector<8x128xi32>
    %366 = arith.cmpi eq, %2, %365 : vector<8x128xi32>
    %c2_i32_113 = arith.constant 2 : i32
    %367 = vector.broadcast %c2_i32_113 : i32 to vector<8x128xi32>
    %368 = arith.cmpi eq, %2, %367 : vector<8x128xi32>
    %cst_114 = arith.constant 0.000000e+00 : f32
    %369 = vector.shape_cast %362 : vector<1x1xf32> to vector<1x1xf32>
    %370 = vector.broadcast %369 : vector<1x1xf32> to vector<8x128xf32>
    %371 = vector.broadcast %cst_114 : f32 to vector<8x128xf32>
    %372 = arith.select %368, %370, %371 : vector<8x128xi1>, vector<8x128xf32>
    %373 = vector.shape_cast %355 : vector<1x1xf32> to vector<1x1xf32>
    %374 = vector.broadcast %373 : vector<1x1xf32> to vector<8x128xf32>
    %375 = arith.select %366, %374, %372 : vector<8x128xi1>, vector<8x128xf32>
    %376 = vector.shape_cast %348 : vector<1x1xf32> to vector<1x1xf32>
    %377 = vector.broadcast %376 : vector<1x1xf32> to vector<8x128xf32>
    %378 = arith.select %364, %377, %375 : vector<8x128xi1>, vector<8x128xf32>
    %379 = arith.index_cast %c4_i32 : i32 to index
    %c0_115 = arith.constant 0 : index
    %c0_116 = arith.constant 0 : index
    %380 = vector.load %arg5[%379, %c0_115, %c0_116] : memref<8x8x128xf32, #tpu.memory_space<vmem>>, vector<1x8x128xf32>
    %381 = vector.shape_cast %380 : vector<1x8x128xf32> to vector<8x128xf32>
    %382 = vector.shape_cast %378 : vector<8x128xf32> to vector<1x8x128xf32>
    tpu.vector_store %arg5[%379, %c0_115, %c0_116], %382 {strides = array<i32>} : memref<8x8x128xf32, #tpu.memory_space<vmem>>, vector<1x8x128xf32>,
    %c5_i32 = arith.constant 5 : i32
    %383 = arith.index_cast %c5_i32 : i32 to index
    %c0_117 = arith.constant 0 : index
    %c0_118 = arith.constant 0 : index
    %384 = vector.load %arg3[%383, %c0_117, %c0_118] : memref<8x16x16xf32, #tpu.memory_space<vmem>>, vector<1x16x16xf32>
    %385 = vector.shape_cast %384 : vector<1x16x16xf32> to vector<16x16xf32>
    %386 = arith.index_cast %c5_i32 : i32 to index
    %c0_119 = arith.constant 0 : index
    %c0_120 = arith.constant 0 : index
    %387 = vector.load %arg4[%386, %c0_119, %c0_120] : memref<8x16x16xf32, #tpu.memory_space<vmem>>, vector<1x16x16xf32>
    %388 = vector.shape_cast %387 : vector<1x16x16xf32> to vector<16x16xf32>
    %389 = arith.truncf %388 : vector<16x16xf32> to vector<16x16xbf16>
    %cst_121 = arith.constant dense<0.000000e+00> : vector<16x16xf32>
    %390 = tpu.matmul %0, %389, %cst_121 {dimension_numbers = #tpu.dot_dimension_numbers<[1], [0], [0], [1], [0, 0, 1, 1], [], []>} : vector<16x16xbf16>, vector<16x16xbf16>, vector<16x16xf32> -> vector<16x16xf32>
    %391 = arith.truncf %390 : vector<16x16xf32> to vector<16x16xbf16>
    %cst_122 = arith.constant dense<0.000000e+00> : vector<16x16xf32>
    %392 = tpu.matmul %391, %1, %cst_122 {dimension_numbers = #tpu.dot_dimension_numbers<[1], [0], [0], [1], [0, 0, 1, 1], [], []>} : vector<16x16xbf16>, vector<16x16xbf16>, vector<16x16xf32> -> vector<16x16xf32>
    %cst_123 = arith.constant 0.00104058278 : f32
    %393 = vector.broadcast %cst_123 : f32 to vector<16x16xf32>
    %394 = arith.mulf %392, %393 : vector<16x16xf32>
    %395 = arith.subf %394, %388 : vector<16x16xf32>
    %396 = math.absf %395 : vector<16x16xf32>
    %cst_124 = arith.constant 5.000000e+00 : f32
    %397 = vector.broadcast %cst_124 : f32 to vector<16x16xf32>
    %398 = arith.mulf %397, %396 : vector<16x16xf32>
    %cst_125 = arith.constant 1.000000e+00 : f32
    %399 = vector.broadcast %cst_125 : f32 to vector<16x16xf32>
    %400 = arith.addf %399, %398 : vector<16x16xf32>
    %401 = math.absf %385 : vector<16x16xf32>
    %cst_126 = arith.constant 0.000000e+00 : f32
    %402 = vector.broadcast %cst_126 : f32 to vector<16x16xf32>
    %403 = arith.subf %402, %401 : vector<16x16xf32>
    %404 = math.exp %403 : vector<16x16xf32>
    %cst_127 = arith.constant 0.000000e+00 : f32
    %405 = vector.broadcast %cst_127 : f32 to vector<16x16xf32>
    %406 = arith.maximumf %385, %405 : vector<16x16xf32>
    %407 = arith.mulf %385, %388 : vector<16x16xf32>
    %408 = arith.subf %406, %407 : vector<16x16xf32>
    %cst_128 = arith.constant 1.000000e+00 : f32
    %409 = vector.broadcast %cst_128 : f32 to vector<16x16xf32>
    %410 = arith.addf %409, %404 : vector<16x16xf32>
    %411 = math.log %410 : vector<16x16xf32>
    %412 = arith.addf %408, %411 : vector<16x16xf32>
    %cst_129 = arith.constant 1.000000e+00 : f32
    %413 = vector.broadcast %cst_129 : f32 to vector<16x16xf32>
    %414 = arith.addf %413, %404 : vector<16x16xf32>
    %415 = tpu.reciprocal %414 : vector<16x16xf32> -> vector<16x16xf32>
    %cst_130 = arith.constant 0.000000e+00 : f32
    %416 = vector.broadcast %cst_130 : f32 to vector<16x16xf32>
    %417 = arith.cmpf oge, %385, %416 : vector<16x16xf32>
    %418 = arith.mulf %404, %415 : vector<16x16xf32>
    %419 = arith.select %417, %415, %418 : vector<16x16xi1>, vector<16x16xf32>
    %420 = vector.shape_cast %412 : vector<16x16xf32> to vector<1x16x16xf32>
    %cst_131 = arith.constant dense<0.000000e+00> : vector<1xf32>
    %421 = vector.multi_reduction <add>, %420, %cst_131 [1, 2] : vector<1x16x16xf32> to vector<1xf32>
    %422 = vector.shape_cast %421 : vector<1xf32> to vector<1x1x1xf32>
    %423 = vector.extract %422[0, 0, 0] : f32 from vector<1x1x1xf32>
    %424 = vector.broadcast %423 : f32 to vector<1x1xf32>
    %425 = arith.mulf %419, %388 : vector<16x16xf32>
    %426 = arith.mulf %425, %400 : vector<16x16xf32>
    %427 = vector.shape_cast %426 : vector<16x16xf32> to vector<1x16x16xf32>
    %cst_132 = arith.constant dense<0.000000e+00> : vector<1xf32>
    %428 = vector.multi_reduction <add>, %427, %cst_132 [1, 2] : vector<1x16x16xf32> to vector<1xf32>
    %429 = vector.shape_cast %428 : vector<1xf32> to vector<1x1x1xf32>
    %430 = vector.extract %429[0, 0, 0] : f32 from vector<1x1x1xf32>
    %431 = vector.broadcast %430 : f32 to vector<1x1xf32>
    %432 = arith.addf %419, %388 : vector<16x16xf32>
    %433 = arith.mulf %432, %400 : vector<16x16xf32>
    %434 = vector.shape_cast %433 : vector<16x16xf32> to vector<1x16x16xf32>
    %cst_133 = arith.constant dense<0.000000e+00> : vector<1xf32>
    %435 = vector.multi_reduction <add>, %434, %cst_133 [1, 2] : vector<1x16x16xf32> to vector<1xf32>
    %436 = vector.shape_cast %435 : vector<1xf32> to vector<1x1x1xf32>
    %437 = vector.extract %436[0, 0, 0] : f32 from vector<1x1x1xf32>
    %438 = vector.broadcast %437 : f32 to vector<1x1xf32>
    %c0_i32_134 = arith.constant 0 : i32
    %439 = vector.broadcast %c0_i32_134 : i32 to vector<8x128xi32>
    %440 = arith.cmpi eq, %2, %439 : vector<8x128xi32>
    %c1_i32_135 = arith.constant 1 : i32
    %441 = vector.broadcast %c1_i32_135 : i32 to vector<8x128xi32>
    %442 = arith.cmpi eq, %2, %441 : vector<8x128xi32>
    %c2_i32_136 = arith.constant 2 : i32
    %443 = vector.broadcast %c2_i32_136 : i32 to vector<8x128xi32>
    %444 = arith.cmpi eq, %2, %443 : vector<8x128xi32>
    %cst_137 = arith.constant 0.000000e+00 : f32
    %445 = vector.shape_cast %438 : vector<1x1xf32> to vector<1x1xf32>
    %446 = vector.broadcast %445 : vector<1x1xf32> to vector<8x128xf32>
    %447 = vector.broadcast %cst_137 : f32 to vector<8x128xf32>
    %448 = arith.select %444, %446, %447 : vector<8x128xi1>, vector<8x128xf32>
    %449 = vector.shape_cast %431 : vector<1x1xf32> to vector<1x1xf32>
    %450 = vector.broadcast %449 : vector<1x1xf32> to vector<8x128xf32>
    %451 = arith.select %442, %450, %448 : vector<8x128xi1>, vector<8x128xf32>
    %452 = vector.shape_cast %424 : vector<1x1xf32> to vector<1x1xf32>
    %453 = vector.broadcast %452 : vector<1x1xf32> to vector<8x128xf32>
    %454 = arith.select %440, %453, %451 : vector<8x128xi1>, vector<8x128xf32>
    %455 = arith.index_cast %c5_i32 : i32 to index
    %c0_138 = arith.constant 0 : index
    %c0_139 = arith.constant 0 : index
    %456 = vector.load %arg5[%455, %c0_138, %c0_139] : memref<8x8x128xf32, #tpu.memory_space<vmem>>, vector<1x8x128xf32>
    %457 = vector.shape_cast %456 : vector<1x8x128xf32> to vector<8x128xf32>
    %458 = vector.shape_cast %454 : vector<8x128xf32> to vector<1x8x128xf32>
    tpu.vector_store %arg5[%455, %c0_138, %c0_139], %458 {strides = array<i32>} : memref<8x8x128xf32, #tpu.memory_space<vmem>>, vector<1x8x128xf32>,
    %c6_i32 = arith.constant 6 : i32
    %459 = arith.index_cast %c6_i32 : i32 to index
    %c0_140 = arith.constant 0 : index
    %c0_141 = arith.constant 0 : index
    %460 = vector.load %arg3[%459, %c0_140, %c0_141] : memref<8x16x16xf32, #tpu.memory_space<vmem>>, vector<1x16x16xf32>
    %461 = vector.shape_cast %460 : vector<1x16x16xf32> to vector<16x16xf32>
    %462 = arith.index_cast %c6_i32 : i32 to index
    %c0_142 = arith.constant 0 : index
    %c0_143 = arith.constant 0 : index
    %463 = vector.load %arg4[%462, %c0_142, %c0_143] : memref<8x16x16xf32, #tpu.memory_space<vmem>>, vector<1x16x16xf32>
    %464 = vector.shape_cast %463 : vector<1x16x16xf32> to vector<16x16xf32>
    %465 = arith.truncf %464 : vector<16x16xf32> to vector<16x16xbf16>
    %cst_144 = arith.constant dense<0.000000e+00> : vector<16x16xf32>
    %466 = tpu.matmul %0, %465, %cst_144 {dimension_numbers = #tpu.dot_dimension_numbers<[1], [0], [0], [1], [0, 0, 1, 1], [], []>} : vector<16x16xbf16>, vector<16x16xbf16>, vector<16x16xf32> -> vector<16x16xf32>
    %467 = arith.truncf %466 : vector<16x16xf32> to vector<16x16xbf16>
    %cst_145 = arith.constant dense<0.000000e+00> : vector<16x16xf32>
    %468 = tpu.matmul %467, %1, %cst_145 {dimension_numbers = #tpu.dot_dimension_numbers<[1], [0], [0], [1], [0, 0, 1, 1], [], []>} : vector<16x16xbf16>, vector<16x16xbf16>, vector<16x16xf32> -> vector<16x16xf32>
    %cst_146 = arith.constant 0.00104058278 : f32
    %469 = vector.broadcast %cst_146 : f32 to vector<16x16xf32>
    %470 = arith.mulf %468, %469 : vector<16x16xf32>
    %471 = arith.subf %470, %464 : vector<16x16xf32>
    %472 = math.absf %471 : vector<16x16xf32>
    %cst_147 = arith.constant 5.000000e+00 : f32
    %473 = vector.broadcast %cst_147 : f32 to vector<16x16xf32>
    %474 = arith.mulf %473, %472 : vector<16x16xf32>
    %cst_148 = arith.constant 1.000000e+00 : f32
    %475 = vector.broadcast %cst_148 : f32 to vector<16x16xf32>
    %476 = arith.addf %475, %474 : vector<16x16xf32>
    %477 = math.absf %461 : vector<16x16xf32>
    %cst_149 = arith.constant 0.000000e+00 : f32
    %478 = vector.broadcast %cst_149 : f32 to vector<16x16xf32>
    %479 = arith.subf %478, %477 : vector<16x16xf32>
    %480 = math.exp %479 : vector<16x16xf32>
    %cst_150 = arith.constant 0.000000e+00 : f32
    %481 = vector.broadcast %cst_150 : f32 to vector<16x16xf32>
    %482 = arith.maximumf %461, %481 : vector<16x16xf32>
    %483 = arith.mulf %461, %464 : vector<16x16xf32>
    %484 = arith.subf %482, %483 : vector<16x16xf32>
    %cst_151 = arith.constant 1.000000e+00 : f32
    %485 = vector.broadcast %cst_151 : f32 to vector<16x16xf32>
    %486 = arith.addf %485, %480 : vector<16x16xf32>
    %487 = math.log %486 : vector<16x16xf32>
    %488 = arith.addf %484, %487 : vector<16x16xf32>
    %cst_152 = arith.constant 1.000000e+00 : f32
    %489 = vector.broadcast %cst_152 : f32 to vector<16x16xf32>
    %490 = arith.addf %489, %480 : vector<16x16xf32>
    %491 = tpu.reciprocal %490 : vector<16x16xf32> -> vector<16x16xf32>
    %cst_153 = arith.constant 0.000000e+00 : f32
    %492 = vector.broadcast %cst_153 : f32 to vector<16x16xf32>
    %493 = arith.cmpf oge, %461, %492 : vector<16x16xf32>
    %494 = arith.mulf %480, %491 : vector<16x16xf32>
    %495 = arith.select %493, %491, %494 : vector<16x16xi1>, vector<16x16xf32>
    %496 = vector.shape_cast %488 : vector<16x16xf32> to vector<1x16x16xf32>
    %cst_154 = arith.constant dense<0.000000e+00> : vector<1xf32>
    %497 = vector.multi_reduction <add>, %496, %cst_154 [1, 2] : vector<1x16x16xf32> to vector<1xf32>
    %498 = vector.shape_cast %497 : vector<1xf32> to vector<1x1x1xf32>
    %499 = vector.extract %498[0, 0, 0] : f32 from vector<1x1x1xf32>
    %500 = vector.broadcast %499 : f32 to vector<1x1xf32>
    %501 = arith.mulf %495, %464 : vector<16x16xf32>
    %502 = arith.mulf %501, %476 : vector<16x16xf32>
    %503 = vector.shape_cast %502 : vector<16x16xf32> to vector<1x16x16xf32>
    %cst_155 = arith.constant dense<0.000000e+00> : vector<1xf32>
    %504 = vector.multi_reduction <add>, %503, %cst_155 [1, 2] : vector<1x16x16xf32> to vector<1xf32>
    %505 = vector.shape_cast %504 : vector<1xf32> to vector<1x1x1xf32>
    %506 = vector.extract %505[0, 0, 0] : f32 from vector<1x1x1xf32>
    %507 = vector.broadcast %506 : f32 to vector<1x1xf32>
    %508 = arith.addf %495, %464 : vector<16x16xf32>
    %509 = arith.mulf %508, %476 : vector<16x16xf32>
    %510 = vector.shape_cast %509 : vector<16x16xf32> to vector<1x16x16xf32>
    %cst_156 = arith.constant dense<0.000000e+00> : vector<1xf32>
    %511 = vector.multi_reduction <add>, %510, %cst_156 [1, 2] : vector<1x16x16xf32> to vector<1xf32>
    %512 = vector.shape_cast %511 : vector<1xf32> to vector<1x1x1xf32>
    %513 = vector.extract %512[0, 0, 0] : f32 from vector<1x1x1xf32>
    %514 = vector.broadcast %513 : f32 to vector<1x1xf32>
    %c0_i32_157 = arith.constant 0 : i32
    %515 = vector.broadcast %c0_i32_157 : i32 to vector<8x128xi32>
    %516 = arith.cmpi eq, %2, %515 : vector<8x128xi32>
    %c1_i32_158 = arith.constant 1 : i32
    %517 = vector.broadcast %c1_i32_158 : i32 to vector<8x128xi32>
    %518 = arith.cmpi eq, %2, %517 : vector<8x128xi32>
    %c2_i32_159 = arith.constant 2 : i32
    %519 = vector.broadcast %c2_i32_159 : i32 to vector<8x128xi32>
    %520 = arith.cmpi eq, %2, %519 : vector<8x128xi32>
    %cst_160 = arith.constant 0.000000e+00 : f32
    %521 = vector.shape_cast %514 : vector<1x1xf32> to vector<1x1xf32>
    %522 = vector.broadcast %521 : vector<1x1xf32> to vector<8x128xf32>
    %523 = vector.broadcast %cst_160 : f32 to vector<8x128xf32>
    %524 = arith.select %520, %522, %523 : vector<8x128xi1>, vector<8x128xf32>
    %525 = vector.shape_cast %507 : vector<1x1xf32> to vector<1x1xf32>
    %526 = vector.broadcast %525 : vector<1x1xf32> to vector<8x128xf32>
    %527 = arith.select %518, %526, %524 : vector<8x128xi1>, vector<8x128xf32>
    %528 = vector.shape_cast %500 : vector<1x1xf32> to vector<1x1xf32>
    %529 = vector.broadcast %528 : vector<1x1xf32> to vector<8x128xf32>
    %530 = arith.select %516, %529, %527 : vector<8x128xi1>, vector<8x128xf32>
    %531 = arith.index_cast %c6_i32 : i32 to index
    %c0_161 = arith.constant 0 : index
    %c0_162 = arith.constant 0 : index
    %532 = vector.load %arg5[%531, %c0_161, %c0_162] : memref<8x8x128xf32, #tpu.memory_space<vmem>>, vector<1x8x128xf32>
    %533 = vector.shape_cast %532 : vector<1x8x128xf32> to vector<8x128xf32>
    %534 = vector.shape_cast %530 : vector<8x128xf32> to vector<1x8x128xf32>
    tpu.vector_store %arg5[%531, %c0_161, %c0_162], %534 {strides = array<i32>} : memref<8x8x128xf32, #tpu.memory_space<vmem>>, vector<1x8x128xf32>,
    %c7_i32 = arith.constant 7 : i32
    %535 = arith.index_cast %c7_i32 : i32 to index
    %c0_163 = arith.constant 0 : index
    %c0_164 = arith.constant 0 : index
    %536 = vector.load %arg3[%535, %c0_163, %c0_164] : memref<8x16x16xf32, #tpu.memory_space<vmem>>, vector<1x16x16xf32>
    %537 = vector.shape_cast %536 : vector<1x16x16xf32> to vector<16x16xf32>
    %538 = arith.index_cast %c7_i32 : i32 to index
    %c0_165 = arith.constant 0 : index
    %c0_166 = arith.constant 0 : index
    %539 = vector.load %arg4[%538, %c0_165, %c0_166] : memref<8x16x16xf32, #tpu.memory_space<vmem>>, vector<1x16x16xf32>
    %540 = vector.shape_cast %539 : vector<1x16x16xf32> to vector<16x16xf32>
    %541 = arith.truncf %540 : vector<16x16xf32> to vector<16x16xbf16>
    %cst_167 = arith.constant dense<0.000000e+00> : vector<16x16xf32>
    %542 = tpu.matmul %0, %541, %cst_167 {dimension_numbers = #tpu.dot_dimension_numbers<[1], [0], [0], [1], [0, 0, 1, 1], [], []>} : vector<16x16xbf16>, vector<16x16xbf16>, vector<16x16xf32> -> vector<16x16xf32>
    %543 = arith.truncf %542 : vector<16x16xf32> to vector<16x16xbf16>
    %cst_168 = arith.constant dense<0.000000e+00> : vector<16x16xf32>
    %544 = tpu.matmul %543, %1, %cst_168 {dimension_numbers = #tpu.dot_dimension_numbers<[1], [0], [0], [1], [0, 0, 1, 1], [], []>} : vector<16x16xbf16>, vector<16x16xbf16>, vector<16x16xf32> -> vector<16x16xf32>
    %cst_169 = arith.constant 0.00104058278 : f32
    %545 = vector.broadcast %cst_169 : f32 to vector<16x16xf32>
    %546 = arith.mulf %544, %545 : vector<16x16xf32>
    %547 = arith.subf %546, %540 : vector<16x16xf32>
    %548 = math.absf %547 : vector<16x16xf32>
    %cst_170 = arith.constant 5.000000e+00 : f32
    %549 = vector.broadcast %cst_170 : f32 to vector<16x16xf32>
    %550 = arith.mulf %549, %548 : vector<16x16xf32>
    %cst_171 = arith.constant 1.000000e+00 : f32
    %551 = vector.broadcast %cst_171 : f32 to vector<16x16xf32>
    %552 = arith.addf %551, %550 : vector<16x16xf32>
    %553 = math.absf %537 : vector<16x16xf32>
    %cst_172 = arith.constant 0.000000e+00 : f32
    %554 = vector.broadcast %cst_172 : f32 to vector<16x16xf32>
    %555 = arith.subf %554, %553 : vector<16x16xf32>
    %556 = math.exp %555 : vector<16x16xf32>
    %cst_173 = arith.constant 0.000000e+00 : f32
    %557 = vector.broadcast %cst_173 : f32 to vector<16x16xf32>
    %558 = arith.maximumf %537, %557 : vector<16x16xf32>
    %559 = arith.mulf %537, %540 : vector<16x16xf32>
    %560 = arith.subf %558, %559 : vector<16x16xf32>
    %cst_174 = arith.constant 1.000000e+00 : f32
    %561 = vector.broadcast %cst_174 : f32 to vector<16x16xf32>
    %562 = arith.addf %561, %556 : vector<16x16xf32>
    %563 = math.log %562 : vector<16x16xf32>
    %564 = arith.addf %560, %563 : vector<16x16xf32>
    %cst_175 = arith.constant 1.000000e+00 : f32
    %565 = vector.broadcast %cst_175 : f32 to vector<16x16xf32>
    %566 = arith.addf %565, %556 : vector<16x16xf32>
    %567 = tpu.reciprocal %566 : vector<16x16xf32> -> vector<16x16xf32>
    %cst_176 = arith.constant 0.000000e+00 : f32
    %568 = vector.broadcast %cst_176 : f32 to vector<16x16xf32>
    %569 = arith.cmpf oge, %537, %568 : vector<16x16xf32>
    %570 = arith.mulf %556, %567 : vector<16x16xf32>
    %571 = arith.select %569, %567, %570 : vector<16x16xi1>, vector<16x16xf32>
    %572 = vector.shape_cast %564 : vector<16x16xf32> to vector<1x16x16xf32>
    %cst_177 = arith.constant dense<0.000000e+00> : vector<1xf32>
    %573 = vector.multi_reduction <add>, %572, %cst_177 [1, 2] : vector<1x16x16xf32> to vector<1xf32>
    %574 = vector.shape_cast %573 : vector<1xf32> to vector<1x1x1xf32>
    %575 = vector.extract %574[0, 0, 0] : f32 from vector<1x1x1xf32>
    %576 = vector.broadcast %575 : f32 to vector<1x1xf32>
    %577 = arith.mulf %571, %540 : vector<16x16xf32>
    %578 = arith.mulf %577, %552 : vector<16x16xf32>
    %579 = vector.shape_cast %578 : vector<16x16xf32> to vector<1x16x16xf32>
    %cst_178 = arith.constant dense<0.000000e+00> : vector<1xf32>
    %580 = vector.multi_reduction <add>, %579, %cst_178 [1, 2] : vector<1x16x16xf32> to vector<1xf32>
    %581 = vector.shape_cast %580 : vector<1xf32> to vector<1x1x1xf32>
    %582 = vector.extract %581[0, 0, 0] : f32 from vector<1x1x1xf32>
    %583 = vector.broadcast %582 : f32 to vector<1x1xf32>
    %584 = arith.addf %571, %540 : vector<16x16xf32>
    %585 = arith.mulf %584, %552 : vector<16x16xf32>
    %586 = vector.shape_cast %585 : vector<16x16xf32> to vector<1x16x16xf32>
    %cst_179 = arith.constant dense<0.000000e+00> : vector<1xf32>
    %587 = vector.multi_reduction <add>, %586, %cst_179 [1, 2] : vector<1x16x16xf32> to vector<1xf32>
    %588 = vector.shape_cast %587 : vector<1xf32> to vector<1x1x1xf32>
    %589 = vector.extract %588[0, 0, 0] : f32 from vector<1x1x1xf32>
    %590 = vector.broadcast %589 : f32 to vector<1x1xf32>
    %c0_i32_180 = arith.constant 0 : i32
    %591 = vector.broadcast %c0_i32_180 : i32 to vector<8x128xi32>
    %592 = arith.cmpi eq, %2, %591 : vector<8x128xi32>
    %c1_i32_181 = arith.constant 1 : i32
    %593 = vector.broadcast %c1_i32_181 : i32 to vector<8x128xi32>
    %594 = arith.cmpi eq, %2, %593 : vector<8x128xi32>
    %c2_i32_182 = arith.constant 2 : i32
    %595 = vector.broadcast %c2_i32_182 : i32 to vector<8x128xi32>
    %596 = arith.cmpi eq, %2, %595 : vector<8x128xi32>
    %cst_183 = arith.constant 0.000000e+00 : f32
    %597 = vector.shape_cast %590 : vector<1x1xf32> to vector<1x1xf32>
    %598 = vector.broadcast %597 : vector<1x1xf32> to vector<8x128xf32>
    %599 = vector.broadcast %cst_183 : f32 to vector<8x128xf32>
    %600 = arith.select %596, %598, %599 : vector<8x128xi1>, vector<8x128xf32>
    %601 = vector.shape_cast %583 : vector<1x1xf32> to vector<1x1xf32>
    %602 = vector.broadcast %601 : vector<1x1xf32> to vector<8x128xf32>
    %603 = arith.select %594, %602, %600 : vector<8x128xi1>, vector<8x128xf32>
    %604 = vector.shape_cast %576 : vector<1x1xf32> to vector<1x1xf32>
    %605 = vector.broadcast %604 : vector<1x1xf32> to vector<8x128xf32>
    %606 = arith.select %592, %605, %603 : vector<8x128xi1>, vector<8x128xf32>
    %607 = arith.index_cast %c7_i32 : i32 to index
    %c0_184 = arith.constant 0 : index
    %c0_185 = arith.constant 0 : index
    %608 = vector.load %arg5[%607, %c0_184, %c0_185] : memref<8x8x128xf32, #tpu.memory_space<vmem>>, vector<1x8x128xf32>
    %609 = vector.shape_cast %608 : vector<1x8x128xf32> to vector<8x128xf32>
    %610 = vector.shape_cast %606 : vector<8x128xf32> to vector<1x8x128xf32>
    tpu.vector_store %arg5[%607, %c0_184, %c0_185], %610 {strides = array<i32>} : memref<8x8x128xf32, #tpu.memory_space<vmem>>, vector<1x8x128xf32>,
    %c8_i32 = arith.constant 8 : i32
    return
  }
  func.func @transform_0(%arg0: i32) -> (i32, i32) {
    %c0_i32 = arith.constant 0 : i32
    %c0_i32_0 = arith.constant 0 : i32
    %c0_i32_1 = arith.constant 0 : i32
    return %c0_i32, %c0_i32_0 : i32, i32
  }
  func.func @transform_1(%arg0: i32) -> (i32, i32) {
    %c0_i32 = arith.constant 0 : i32
    %c0_i32_0 = arith.constant 0 : i32
    %c0_i32_1 = arith.constant 0 : i32
    return %c0_i32, %c0_i32_0 : i32, i32
  }
  func.func @transform_2(%arg0: i32) -> (i32, i32, i32) {
    %c0_i32 = arith.constant 0 : i32
    %c0_i32_0 = arith.constant 0 : i32
    %c0_i32_1 = arith.constant 0 : i32
    return %arg0, %c0_i32, %c0_i32_0 : i32, i32, i32
  }
  func.func @transform_3(%arg0: i32) -> (i32, i32, i32) {
    %c0_i32 = arith.constant 0 : i32
    %c0_i32_0 = arith.constant 0 : i32
    %c0_i32_1 = arith.constant 0 : i32
    return %arg0, %c0_i32, %c0_i32_0 : i32, i32, i32
  }
  func.func @transform_4(%arg0: i32) -> (i32, i32, i32) {
    %c0_i32 = arith.constant 0 : i32
    %c0_i32_0 = arith.constant 0 : i32
    %c0_i32_1 = arith.constant 0 : i32
    return %arg0, %c0_i32, %c0_i32_0 : i32, i32, i32
  }
}

</mosaic_0001>

<llo_original>
// kernel: tpu_custom_call.1
$region0: #{tpu_custom_call.1}
  #allocation0 [shape = 'u32[]', space=smem, size = 0x4, offset = 0x4, fixed_abs, tag = 'smem constant byte address 0x4 - core index']
  #allocation1 [shape = 'u32[72,128]{1,0:T(1,128)}', space=vmem, size = 0x9000, scoped, tag = 'internal scratch']
  %s0 = inlined_call_operand.hbm [shape: bf16[16,16], index: 0, kind: input, shape index: {}]
  %s1 = inlined_call_operand.hbm [shape: bf16[16,16], index: 1, kind: input, shape index: {}]
  %s2 = inlined_call_operand.hbm [shape: f32[8,16,16], index: 2, kind: input, shape index: {}]
  %s3 = inlined_call_operand.hbm [shape: f32[8,16,16], index: 3, kind: input, shape index: {}]
  %s4 = inlined_call_operand.hbm [shape: f32[8,8,128], index: 4, kind: output, shape index: {}]
  %s5 = sld [smem:[#allocation0]]
  $region42: #{tpu_custom_call.1} parent=0
    _
  %s7 = ssub.s32 1, %s5
  %s8 = scalar_select 0, %s7, %s5
  $region1: #{tpu_custom_call.1} parent=0
    #allocation2 [shape = 'u8[4096]{0}', space=vmem, size = 0x1000, scoped, tag = 'input window, operand 0, single buffered']
    #allocation3 [shape = 's32[1]{0}', space=sflag, size = 0x4, scoped, tag = 'scoped memory for tpu_custom_call.1']
    #allocation4 [shape = 's32[1]{0}', space=sflag, size = 0x4, scoped, tag = 'scoped memory for tpu_custom_call.1']
    #allocation5 [shape = 'u8[4096]{0}', space=vmem, size = 0x1000, scoped, tag = 'input window, operand 1, single buffered']
    #allocation6 [shape = 's32[1]{0}', space=sflag, size = 0x4, scoped, tag = 'scoped memory for tpu_custom_call.1']
    #allocation7 [shape = 'u8[65536]{0}', space=vmem, size = 0x10000, scoped, tag = 'input window, operand 2, single buffered']
    #allocation8 [shape = 'u8[65536]{0}', space=vmem, size = 0x10000, scoped, tag = 'input window, operand 3, single buffered']
    #allocation9 [shape = 's32[1]{0}', space=sflag, size = 0x4, scoped, tag = 'scoped memory for tpu_custom_call.1']
    #allocation10 [shape = 'u8[32768]{0}', space=vmem, size = 0x8000, scoped, tag = 'output window, operand 0, single buffered']
    %9 = vsyncpa [#allocation3], 0
    %10 = vsyncpa [#allocation6], 0
    %11 = vsyncpa [#allocation9], 0
    %12 = vsyncpa [#allocation4], 0
    // Predicated region
    $region2: #{tpu_custom_call.1} parent=1 // pred_check
      _
    $region3: #{tpu_custom_call.1} parent=1 // pred_check_branch
      %14 = sbr.rel (0) target = $region5
    $region4: #{tpu_custom_call.1} parent=1 // pred_region
      %16 = vsyncadd [#allocation3], 0
      %s17 = sshll.u32 %s0, 4
      %s18 = int_to_ptr.hbm [resolvable:$true] %s17
      %s19 = sshll.u32 [#allocation2], 4
      %s20 = int_to_ptr.vmem [resolvable:$true] %s19
      %25 = dma.hbm_to_vmem [thread:$0]  %s18, 128, %s20, [#allocation3], 64, 64, 4
    $region5: #{tpu_custom_call.1} parent=1 // pred_fallthru
      _
    // Predicated region
    $region6: #{tpu_custom_call.1} parent=1 // pred_check
      _
    $region7: #{tpu_custom_call.1} parent=1 // pred_check_branch
      %27 = sbr.rel (0) target = $region9
    $region8: #{tpu_custom_call.1} parent=1 // pred_region
      %29 = vsyncadd [#allocation6], 0
      %s30 = sshll.u32 %s1, 4
      %s31 = int_to_ptr.hbm [resolvable:$true] %s30
      %s32 = sshll.u32 [#allocation5], 4
      %s33 = int_to_ptr.vmem [resolvable:$true] %s32
      %38 = dma.hbm_to_vmem [thread:$0]  %s31, 128, %s33, [#allocation6], 64, 64, 4
    $region9: #{tpu_custom_call.1} parent=1 // pred_fallthru
      _
    // Predicated region
    $region10: #{tpu_custom_call.1} parent=1 // pred_check
      _
    $region11: #{tpu_custom_call.1} parent=1 // pred_check_branch
      %40 = sbr.rel (0) target = $region13
    $region12: #{tpu_custom_call.1} parent=1 // pred_region
      %42 = vsyncadd [#allocation6], 0
      %s43 = sshll.u32 %s2, 4
      %s44 = int_to_ptr.hbm [resolvable:$true] %s43
      %s45 = sshll.u32 [#allocation7], 4
      %s46 = int_to_ptr.vmem [resolvable:$true] %s45
      %51 = dma.hbm_to_vmem [thread:$0]  %s44, 2048, %s46, [#allocation6], 128, 128, 8
    $region13: #{tpu_custom_call.1} parent=1 // pred_fallthru
      _
    // Predicated region
    $region14: #{tpu_custom_call.1} parent=1 // pred_check
      _
    $region15: #{tpu_custom_call.1} parent=1 // pred_check_branch
      %53 = sbr.rel (0) target = $region17
    $region16: #{tpu_custom_call.1} parent=1 // pred_region
      %55 = vsyncadd [#allocation9], 0
      %s56 = sshll.u32 %s3, 4
      %s57 = int_to_ptr.hbm [resolvable:$true] %s56
      %s58 = sshll.u32 [#allocation8], 4
      %s59 = int_to_ptr.vmem [resolvable:$true] %s58
      %64 = dma.hbm_to_vmem [thread:$0]  %s57, 2048, %s59, [#allocation9], 128, 128, 8
    $region17: #{tpu_custom_call.1} parent=1 // pred_fallthru
      _
    // Predicated region
    $region18: #{tpu_custom_call.1} parent=1 // pred_check
      _
    $region19: #{tpu_custom_call.1} parent=1 // pred_check_branch
      %66 = sbr.rel (0) target = $region21
    $region20: #{tpu_custom_call.1} parent=1 // pred_region
      %68 = dma.done [#allocation3], 128
    $region21: #{tpu_custom_call.1} parent=1 // pred_fallthru
      _
    // Predicated region
    $region22: #{tpu_custom_call.1} parent=1 // pred_check
      _
    $region23: #{tpu_custom_call.1} parent=1 // pred_check_branch
      %70 = sbr.rel (0) target = $region25
    $region24: #{tpu_custom_call.1} parent=1 // pred_region
      %72 = dma.done [#allocation6], 128
    $region25: #{tpu_custom_call.1} parent=1 // pred_fallthru
      _
    // Predicated region
    $region26: #{tpu_custom_call.1} parent=1 // pred_check
      _
    $region27: #{tpu_custom_call.1} parent=1 // pred_check_branch
      %74 = sbr.rel (0) target = $region29
    $region28: #{tpu_custom_call.1} parent=1 // pred_region
      %76 = dma.done [#allocation6], 2048
    $region29: #{tpu_custom_call.1} parent=1 // pred_fallthru
      _
    // Predicated region
    $region30: #{tpu_custom_call.1} parent=1 // pred_check
      _
    $region31: #{tpu_custom_call.1} parent=1 // pred_check_branch
      %78 = sbr.rel (0) target = $region33
    $region32: #{tpu_custom_call.1} parent=1 // pred_region
      %80 = dma.done [#allocation9], 2048
    $region33: #{tpu_custom_call.1} parent=1 // pred_fallthru
      _
    %v82 = vld [vmem:[#allocation2] sm:$0xf]
    %v83 = vld [vmem:[#allocation2 + $0x4] sm:$0xf]
    %v84 = vld [vmem:[#allocation5] sm:$0xf]
    %v85 = vld [vmem:[#allocation5 + $0x4] sm:$0xf]
    %v86 = vlaneseq
    %v87 = vand.u32 %v86, 127
    %v88 = vld [vmem:[#allocation7] sm:$0xff]
    %v89 = vld [vmem:[#allocation7 + $0x8] sm:$0xff]
    %v90 = vld [vmem:[#allocation8] sm:$0xff]
    %v91 = vld [vmem:[#allocation8 + $0x8] sm:$0xff]
    %v92 = vpack.c.bf16 %v91, %v90
    %v95 = vunpack.c.l.b16 %v82
    %v96 = vunpack.c.l.b16 %v83
    %v97 = vpack.c.b16 %v96, %v95
    %vm98 = vcmask 130048
    %v100 = vsel %vm98, %v97, 0
    %102 = vmatpush.bf16.msra.mxu0 0
    %103 = vmatpush.bf16.msra.mxu0 0
    %104 = vmatpush.bf16.msra.mxu0 0
    %105 = vmatpush.bf16.msra.mxu0 0
    %106 = vmatpush.bf16.msra.mxu0 0
    %107 = vmatpush.bf16.msra.mxu0 0
    %108 = vmatpush.bf16.msra.mxu0 0
    %109 = vmatpush.bf16.msra.mxu0 %v92
    %110 = vmatmul.bf16.gmra.mxu0 %v100
    %v111 = vpop.f32.mrf.mxu0
    %v112 = vadd.f32 0.0, %v111
    %v113 = vpop.f32.mrf.mxu0
    %v114 = vadd.f32 0.0, %v113
    %115 = vdwg.mxu0
    %v116 = vpack.c.bf16 %v114, %v112
    %v119 = vunpack.c.l.b16 %v84
    %v120 = vunpack.c.l.b16 %v85
    %v121 = vpack.c.b16 %v120, %v119
    %v124 = vsel %vm98, %v116, 0
    %126 = vmatpush.bf16.msra.mxu0 0
    %127 = vmatpush.bf16.msra.mxu0 0
    %128 = vmatpush.bf16.msra.mxu0 0
    %129 = vmatpush.bf16.msra.mxu0 0
    %130 = vmatpush.bf16.msra.mxu0 0
    %131 = vmatpush.bf16.msra.mxu0 0
    %132 = vmatpush.bf16.msra.mxu0 0
    %133 = vmatpush.bf16.msra.mxu0 %v121
    %134 = vmatmul.bf16.gmra.mxu0 %v124
    %v135 = vpop.f32.mrf.mxu0
    %v136 = vadd.f32 0.0, %v135
    %v137 = vpop.f32.mrf.mxu0
    %v138 = vadd.f32 0.0, %v137
    %139 = vdwg.mxu0
    %v140 = vmul.f32 %v136, 0.0010405828
    %v141 = vmul.f32 %v138, 0.0010405828
    %v142 = vsub.f32 %v140, %v90
    %v143 = vsub.f32 %v141, %v91
    %v144 = vand.u32 2147483647, %v142
    %v145 = vand.u32 2147483647, %v143
    %v146 = vmul.f32 %v144, 5.0
    %v147 = vmul.f32 %v145, 5.0
    %v148 = vadd.f32 %v146, 1.0
    %v149 = vadd.f32 %v147, 1.0
    %v150 = vand.u32 2147483647, %v88
    %v151 = vand.u32 2147483647, %v89
    %v152 = vsub.f32 0.0, %v150
    %v153 = vsub.f32 0.0, %v151
    %v154 = vmul.f32 %v152, 1.442695
    %v155 = vpow.pop %v154
    %v156 = vmul.f32 %v153, 1.442695
    %v157 = vpow.pop %v156
    %v158 = vmax.f32 %v88, 0.0
    %v159 = vmax.f32 %v89, 0.0
    %v160 = vmul.f32 %v88, %v90
    %v161 = vmul.f32 %v89, %v91
    %v162 = vsub.f32 %v158, %v160
    %v163 = vsub.f32 %v159, %v161
    %v164 = vadd.f32 %v155, 1.0
    %v165 = vadd.f32 %v157, 1.0
    %v166 = vlog2.pop %v164
    %v167 = vmul.f32 %v166, 0.6931472
    %v168 = vlog2.pop %v165
    %v169 = vmul.f32 %v168, 0.6931472
    %v170 = vadd.f32 %v162, %v167
    %v171 = vadd.f32 %v163, %v169
    %v172 = vrcp.pop %v164
    %v173 = vmul.f32 %v164, %v172
    %v174 = vsub.f32 1.0, %v173
    %v175 = vmul.f32 %v172, %v174
    %v176 = vadd.f32 %v172, %v175
    %vm177 = vweird.f32 %v164
    %vm178 = vweird.f32 %v172
    %vm179 = vmor %vm177, %vm178
    %v180 = vsel %vm179, %v172, %v176
    %v181 = vand.u32 2147483647, %v164
    %vm182 = vcmp.eq.f32.partialorder %v181, 8.507059e+37
    %v183 = vand.u32 %v164, 2147483648
    %v184 = vor.u32 1.1754944e-38, %v183
    %v185 = vsel %vm182, %v184, %v180
    %v186 = vrcp.pop %v165
    %v187 = vmul.f32 %v165, %v186
    %v188 = vsub.f32 1.0, %v187
    %v189 = vmul.f32 %v186, %v188
    %v190 = vadd.f32 %v186, %v189
    %vm191 = vweird.f32 %v165
    %vm192 = vweird.f32 %v186
    %vm193 = vmor %vm191, %vm192
    %v194 = vsel %vm193, %v186, %v190
    %v195 = vand.u32 2147483647, %v165
    %vm196 = vcmp.eq.f32.partialorder %v195, 8.507059e+37
    %v197 = vand.u32 %v165, 2147483648
    %v198 = vor.u32 1.1754944e-38, %v197
    %v199 = vsel %vm196, %v198, %v194
    %vm200 = vcmp.ge.f32.partialorder %v88, 0.0
    %vm201 = vcmp.ge.f32.partialorder %v89, 0.0
    %v202 = vmul.f32 %v155, %v185
    %v203 = vmul.f32 %v157, %v199
    %v204 = vsel %vm200, %v185, %v202
    %v205 = vsel %vm201, %v199, %v203
    %v206 = vsel %vm98, %v170, 0.0
    %v207 = vsel %vm98, %v171, 0.0
    %v208 = vadd.f32 %v206, %v207
    %209 = vadd.xlane.f32.xlu0 %v208
    %v210 = vpop.xlane.xlu0 %209
    %v211 = vrot.slane %v210, 4
    %v212 = vadd.f32 %v210, %v211
    %v213 = vrot.slane %v212, 2
    %v214 = vadd.f32 %v212, %v213
    %v215 = vrot.slane %v214, 1
    %v216 = vadd.f32 %v214, %v215
    %s217 = vtos %v216
    %v218 = vmul.f32 %v204, %v90
    %v219 = vmul.f32 %v205, %v91
    %v220 = vmul.f32 %v218, %v148
    %v221 = vmul.f32 %v219, %v149
    %v222 = vsel %vm98, %v220, 0.0
    %v223 = vsel %vm98, %v221, 0.0
    %v224 = vadd.f32 %v222, %v223
    %225 = vadd.xlane.f32.xlu0 %v224
    %v226 = vpop.xlane.xlu0 %225
    %v227 = vrot.slane %v226, 4
    %v228 = vadd.f32 %v226, %v227
    %v229 = vrot.slane %v228, 2
    %v230 = vadd.f32 %v228, %v229
    %v231 = vrot.slane %v230, 1
    %v232 = vadd.f32 %v230, %v231
    %s233 = vtos %v232
    %v234 = vadd.f32 %v204, %v90
    %v235 = vadd.f32 %v205, %v91
    %v236 = vmul.f32 %v234, %v148
    %v237 = vmul.f32 %v235, %v149
    %v238 = vsel %vm98, %v236, 0.0
    %v239 = vsel %vm98, %v237, 0.0
    %v240 = vadd.f32 %v238, %v239
    %241 = vadd.xlane.f32.xlu0 %v240
    %v242 = vpop.xlane.xlu0 %241
    %v243 = vrot.slane %v242, 4
    %v244 = vadd.f32 %v242, %v243
    %v245 = vrot.slane %v244, 2
    %v246 = vadd.f32 %v244, %v245
    %v247 = vrot.slane %v246, 1
    %v248 = vadd.f32 %v246, %v247
    %s249 = vtos %v248
    %vm250 = vcmp.eq.s32.totalorder %v87, 0
    %vm251 = vcmp.eq.s32.totalorder %v87, 1
    %vm252 = vcmp.eq.s32.totalorder %v87, 2
    %v253 = vstv %s249
    %v254 = vsel %vm252, %v253, 0.0
    %v255 = vstv %s233
    %v256 = vsel %vm251, %v255, %v254
    %v257 = vstv %s217
    %v258 = vsel %vm250, %v257, %v256
    %259 = vst [vmem:[#allocation10] sm:$0xff] %v258
    %s260 = scalar_lea.vmem [#allocation7], 16
    %v261 = vld [vmem:[%s260] sm:$0xff]
    %v262 = vld [vmem:[%s260 + $0x8] sm:$0xff]
    %s263 = scalar_lea.vmem [#allocation8], 16
    %v264 = vld [vmem:[%s263] sm:$0xff]
    %v265 = vld [vmem:[%s263 + $0x8] sm:$0xff]
    %v266 = vpack.c.bf16 %v265, %v264
    %267 = vmatpush.bf16.msra.mxu0 0
    %268 = vmatpush.bf16.msra.mxu0 0
    %269 = vmatpush.bf16.msra.mxu0 0
    %270 = vmatpush.bf16.msra.mxu0 0
    %271 = vmatpush.bf16.msra.mxu0 0
    %272 = vmatpush.bf16.msra.mxu0 0
    %273 = vmatpush.bf16.msra.mxu0 0
    %274 = vmatpush.bf16.msra.mxu0 %v266
    %275 = vmatmul.bf16.gmra.mxu0 %v100
    %v276 = vpop.f32.mrf.mxu0
    %v277 = vadd.f32 0.0, %v276
    %v278 = vpop.f32.mrf.mxu0
    %v279 = vadd.f32 0.0, %v278
    %280 = vdwg.mxu0
    %v281 = vpack.c.bf16 %v279, %v277
    %v283 = vsel %vm98, %v281, 0
    %285 = vmatpush.bf16.msra.mxu0 0
    %286 = vmatpush.bf16.msra.mxu0 0
    %287 = vmatpush.bf16.msra.mxu0 0
    %288 = vmatpush.bf16.msra.mxu0 0
    %289 = vmatpush.bf16.msra.mxu0 0
    %290 = vmatpush.bf16.msra.mxu0 0
    %291 = vmatpush.bf16.msra.mxu0 0
    %292 = vmatpush.bf16.msra.mxu0 %v121
    %293 = vmatmul.bf16.gmra.mxu0 %v283
    %v294 = vpop.f32.mrf.mxu0
    %v295 = vadd.f32 0.0, %v294
    %v296 = vpop.f32.mrf.mxu0
    %v297 = vadd.f32 0.0, %v296
    %298 = vdwg.mxu0
    %v299 = vmul.f32 %v295, 0.0010405828
    %v300 = vmul.f32 %v297, 0.0010405828
    %v301 = vsub.f32 %v299, %v264
    %v302 = vsub.f32 %v300, %v265
    %v303 = vand.u32 2147483647, %v301
    %v304 = vand.u32 2147483647, %v302
    %v305 = vmul.f32 %v303, 5.0
    %v306 = vmul.f32 %v304, 5.0
    %v307 = vadd.f32 %v305, 1.0
    %v308 = vadd.f32 %v306, 1.0
    %v309 = vand.u32 2147483647, %v261
    %v310 = vand.u32 2147483647, %v262
    %v311 = vsub.f32 0.0, %v309
    %v312 = vsub.f32 0.0, %v310
    %v313 = vmul.f32 %v311, 1.442695
    %v314 = vpow.pop %v313
    %v315 = vmul.f32 %v312, 1.442695
    %v316 = vpow.pop %v315
    %v317 = vmax.f32 %v261, 0.0
    %v318 = vmax.f32 %v262, 0.0
    %v319 = vmul.f32 %v261, %v264
    %v320 = vmul.f32 %v262, %v265
    %v321 = vsub.f32 %v317, %v319
    %v322 = vsub.f32 %v318, %v320
    %v323 = vadd.f32 %v314, 1.0
    %v324 = vadd.f32 %v316, 1.0
    %v325 = vlog2.pop %v323
    %v326 = vmul.f32 %v325, 0.6931472
    %v327 = vlog2.pop %v324
    %v328 = vmul.f32 %v327, 0.6931472
    %v329 = vadd.f32 %v321, %v326
    %v330 = vadd.f32 %v322, %v328
    %v331 = vrcp.pop %v323
    %v332 = vmul.f32 %v323, %v331
    %v333 = vsub.f32 1.0, %v332
    %v334 = vmul.f32 %v331, %v333
    %v335 = vadd.f32 %v331, %v334
    %vm336 = vweird.f32 %v323
    %vm337 = vweird.f32 %v331
    %vm338 = vmor %vm336, %vm337
    %v339 = vsel %vm338, %v331, %v335
    %v340 = vand.u32 2147483647, %v323
    %vm341 = vcmp.eq.f32.partialorder %v340, 8.507059e+37
    %v342 = vand.u32 %v323, 2147483648
    %v343 = vor.u32 1.1754944e-38, %v342
    %v344 = vsel %vm341, %v343, %v339
    %v345 = vrcp.pop %v324
    %v346 = vmul.f32 %v324, %v345
    %v347 = vsub.f32 1.0, %v346
    %v348 = vmul.f32 %v345, %v347
    %v349 = vadd.f32 %v345, %v348
    %vm350 = vweird.f32 %v324
    %vm351 = vweird.f32 %v345
    %vm352 = vmor %vm350, %vm351
    %v353 = vsel %vm352, %v345, %v349
    %v354 = vand.u32 2147483647, %v324
    %vm355 = vcmp.eq.f32.partialorder %v354, 8.507059e+37
    %v356 = vand.u32 %v324, 2147483648
    %v357 = vor.u32 1.1754944e-38, %v356
    %v358 = vsel %vm355, %v357, %v353
    %vm359 = vcmp.ge.f32.partialorder %v261, 0.0
    %vm360 = vcmp.ge.f32.partialorder %v262, 0.0
    %v361 = vmul.f32 %v314, %v344
    %v362 = vmul.f32 %v316, %v358
    %v363 = vsel %vm359, %v344, %v361
    %v364 = vsel %vm360, %v358, %v362
    %v365 = vsel %vm98, %v329, 0.0
    %v366 = vsel %vm98, %v330, 0.0
    %v367 = vadd.f32 %v365, %v366
    %368 = vadd.xlane.f32.xlu0 %v367
    %v369 = vpop.xlane.xlu0 %368
    %v370 = vrot.slane %v369, 4
    %v371 = vadd.f32 %v369, %v370
    %v372 = vrot.slane %v371, 2
    %v373 = vadd.f32 %v371, %v372
    %v374 = vrot.slane %v373, 1
    %v375 = vadd.f32 %v373, %v374
    %s376 = vtos %v375
    %v377 = vmul.f32 %v363, %v264
    %v378 = vmul.f32 %v364, %v265
    %v379 = vmul.f32 %v377, %v307
    %v380 = vmul.f32 %v378, %v308
    %v381 = vsel %vm98, %v379, 0.0
    %v382 = vsel %vm98, %v380, 0.0
    %v383 = vadd.f32 %v381, %v382
    %384 = vadd.xlane.f32.xlu0 %v383
    %v385 = vpop.xlane.xlu0 %384
    %v386 = vrot.slane %v385, 4
    %v387 = vadd.f32 %v385, %v386
    %v388 = vrot.slane %v387, 2
    %v389 = vadd.f32 %v387, %v388
    %v390 = vrot.slane %v389, 1
    %v391 = vadd.f32 %v389, %v390
    %s392 = vtos %v391
    %v393 = vadd.f32 %v363, %v264
    %v394 = vadd.f32 %v364, %v265
    %v395 = vmul.f32 %v393, %v307
    %v396 = vmul.f32 %v394, %v308
    %v397 = vsel %vm98, %v395, 0.0
    %v398 = vsel %vm98, %v396, 0.0
    %v399 = vadd.f32 %v397, %v398
    %400 = vadd.xlane.f32.xlu0 %v399
    %v401 = vpop.xlane.xlu0 %400
    %v402 = vrot.slane %v401, 4
    %v403 = vadd.f32 %v401, %v402
    %v404 = vrot.slane %v403, 2
    %v405 = vadd.f32 %v403, %v404
    %v406 = vrot.slane %v405, 1
    %v407 = vadd.f32 %v405, %v406
    %s408 = vtos %v407
    %v409 = vstv %s408
    %v410 = vsel %vm252, %v409, 0.0
    %v411 = vstv %s392
    %v412 = vsel %vm251, %v411, %v410
    %v413 = vstv %s376
    %v414 = vsel %vm250, %v413, %v412
    %s415 = scalar_lea.vmem [#allocation10], 8
    %416 = vst [vmem:[%s415] sm:$0xff] %v414
    %s417 = scalar_lea.vmem [#allocation7], 32
    %v418 = vld [vmem:[%s417] sm:$0xff]
    %v419 = vld [vmem:[%s417 + $0x8] sm:$0xff]
    %s420 = scalar_lea.vmem [#allocation8], 32
    %v421 = vld [vmem:[%s420] sm:$0xff]
    %v422 = vld [vmem:[%s420 + $0x8] sm:$0xff]
    %v423 = vpack.c.bf16 %v422, %v421
    %424 = vmatpush.bf16.msra.mxu0 0
    %425 = vmatpush.bf16.msra.mxu0 0
    %426 = vmatpush.bf16.msra.mxu0 0
    %427 = vmatpush.bf16.msra.mxu0 0
    %428 = vmatpush.bf16.msra.mxu0 0
    %429 = vmatpush.bf16.msra.mxu0 0
    %430 = vmatpush.bf16.msra.mxu0 0
    %431 = vmatpush.bf16.msra.mxu0 %v423
    %432 = vmatmul.bf16.gmra.mxu0 %v100
    %v433 = vpop.f32.mrf.mxu0
    %v434 = vadd.f32 0.0, %v433
    %v435 = vpop.f32.mrf.mxu0
    %v436 = vadd.f32 0.0, %v435
    %437 = vdwg.mxu0
    %v438 = vpack.c.bf16 %v436, %v434
    %v440 = vsel %vm98, %v438, 0
    %442 = vmatpush.bf16.msra.mxu0 0
    %443 = vmatpush.bf16.msra.mxu0 0
    %444 = vmatpush.bf16.msra.mxu0 0
    %445 = vmatpush.bf16.msra.mxu0 0
    %446 = vmatpush.bf16.msra.mxu0 0
    %447 = vmatpush.bf16.msra.mxu0 0
    %448 = vmatpush.bf16.msra.mxu0 0
    %449 = vmatpush.bf16.msra.mxu0 %v121
    %450 = vmatmul.bf16.gmra.mxu0 %v440
    %v451 = vpop.f32.mrf.mxu0
    %v452 = vadd.f32 0.0, %v451
    %v453 = vpop.f32.mrf.mxu0
    %v454 = vadd.f32 0.0, %v453
    %455 = vdwg.mxu0
    %v456 = vmul.f32 %v452, 0.0010405828
    %v457 = vmul.f32 %v454, 0.0010405828
    %v458 = vsub.f32 %v456, %v421
    %v459 = vsub.f32 %v457, %v422
    %v460 = vand.u32 2147483647, %v458
    %v461 = vand.u32 2147483647, %v459
    %v462 = vmul.f32 %v460, 5.0
    %v463 = vmul.f32 %v461, 5.0
    %v464 = vadd.f32 %v462, 1.0
    %v465 = vadd.f32 %v463, 1.0
    %v466 = vand.u32 2147483647, %v418
    %v467 = vand.u32 2147483647, %v419
    %v468 = vsub.f32 0.0, %v466
    %v469 = vsub.f32 0.0, %v467
    %v470 = vmul.f32 %v468, 1.442695
    %v471 = vpow.pop %v470
    %v472 = vmul.f32 %v469, 1.442695
    %v473 = vpow.pop %v472
    %v474 = vmax.f32 %v418, 0.0
    %v475 = vmax.f32 %v419, 0.0
    %v476 = vmul.f32 %v418, %v421
    %v477 = vmul.f32 %v419, %v422
    %v478 = vsub.f32 %v474, %v476
    %v479 = vsub.f32 %v475, %v477
    %v480 = vadd.f32 %v471, 1.0
    %v481 = vadd.f32 %v473, 1.0
    %v482 = vlog2.pop %v480
    %v483 = vmul.f32 %v482, 0.6931472
    %v484 = vlog2.pop %v481
    %v485 = vmul.f32 %v484, 0.6931472
    %v486 = vadd.f32 %v478, %v483
    %v487 = vadd.f32 %v479, %v485
    %v488 = vrcp.pop %v480
    %v489 = vmul.f32 %v480, %v488
    %v490 = vsub.f32 1.0, %v489
    %v491 = vmul.f32 %v488, %v490
    %v492 = vadd.f32 %v488, %v491
    %vm493 = vweird.f32 %v480
    %vm494 = vweird.f32 %v488
    %vm495 = vmor %vm493, %vm494
    %v496 = vsel %vm495, %v488, %v492
    %v497 = vand.u32 2147483647, %v480
    %vm498 = vcmp.eq.f32.partialorder %v497, 8.507059e+37
    %v499 = vand.u32 %v480, 2147483648
    %v500 = vor.u32 1.1754944e-38, %v499
    %v501 = vsel %vm498, %v500, %v496
    %v502 = vrcp.pop %v481
    %v503 = vmul.f32 %v481, %v502
    %v504 = vsub.f32 1.0, %v503
    %v505 = vmul.f32 %v502, %v504
    %v506 = vadd.f32 %v502, %v505
    %vm507 = vweird.f32 %v481
    %vm508 = vweird.f32 %v502
    %vm509 = vmor %vm507, %vm508
    %v510 = vsel %vm509, %v502, %v506
    %v511 = vand.u32 2147483647, %v481
    %vm512 = vcmp.eq.f32.partialorder %v511, 8.507059e+37
    %v513 = vand.u32 %v481, 2147483648
    %v514 = vor.u32 1.1754944e-38, %v513
    %v515 = vsel %vm512, %v514, %v510
    %vm516 = vcmp.ge.f32.partialorder %v418, 0.0
    %vm517 = vcmp.ge.f32.partialorder %v419, 0.0
    %v518 = vmul.f32 %v471, %v501
    %v519 = vmul.f32 %v473, %v515
    %v520 = vsel %vm516, %v501, %v518
    %v521 = vsel %vm517, %v515, %v519
    %v522 = vsel %vm98, %v486, 0.0
    %v523 = vsel %vm98, %v487, 0.0
    %v524 = vadd.f32 %v522, %v523
    %525 = vadd.xlane.f32.xlu0 %v524
    %v526 = vpop.xlane.xlu0 %525
    %v527 = vrot.slane %v526, 4
    %v528 = vadd.f32 %v526, %v527
    %v529 = vrot.slane %v528, 2
    %v530 = vadd.f32 %v528, %v529
    %v531 = vrot.slane %v530, 1
    %v532 = vadd.f32 %v530, %v531
    %s533 = vtos %v532
    %v534 = vmul.f32 %v520, %v421
    %v535 = vmul.f32 %v521, %v422
    %v536 = vmul.f32 %v534, %v464
    %v537 = vmul.f32 %v535, %v465
    %v538 = vsel %vm98, %v536, 0.0
    %v539 = vsel %vm98, %v537, 0.0
    %v540 = vadd.f32 %v538, %v539
    %541 = vadd.xlane.f32.xlu0 %v540
    %v542 = vpop.xlane.xlu0 %541
    %v543 = vrot.slane %v542, 4
    %v544 = vadd.f32 %v542, %v543
    %v545 = vrot.slane %v544, 2
    %v546 = vadd.f32 %v544, %v545
    %v547 = vrot.slane %v546, 1
    %v548 = vadd.f32 %v546, %v547
    %s549 = vtos %v548
    %v550 = vadd.f32 %v520, %v421
    %v551 = vadd.f32 %v521, %v422
    %v552 = vmul.f32 %v550, %v464
    %v553 = vmul.f32 %v551, %v465
    %v554 = vsel %vm98, %v552, 0.0
    %v555 = vsel %vm98, %v553, 0.0
    %v556 = vadd.f32 %v554, %v555
    %557 = vadd.xlane.f32.xlu0 %v556
    %v558 = vpop.xlane.xlu0 %557
    %v559 = vrot.slane %v558, 4
    %v560 = vadd.f32 %v558, %v559
    %v561 = vrot.slane %v560, 2
    %v562 = vadd.f32 %v560, %v561
    %v563 = vrot.slane %v562, 1
    %v564 = vadd.f32 %v562, %v563
    %s565 = vtos %v564
    %v566 = vstv %s565
    %v567 = vsel %vm252, %v566, 0.0
    %v568 = vstv %s549
    %v569 = vsel %vm251, %v568, %v567
    %v570 = vstv %s533
    %v571 = vsel %vm250, %v570, %v569
    %s572 = scalar_lea.vmem [#allocation10], 16
    %573 = vst [vmem:[%s572] sm:$0xff] %v571
    %s574 = scalar_lea.vmem [#allocation7], 48
    %v575 = vld [vmem:[%s574] sm:$0xff]
    %v576 = vld [vmem:[%s574 + $0x8] sm:$0xff]
    %s577 = scalar_lea.vmem [#allocation8], 48
    %v578 = vld [vmem:[%s577] sm:$0xff]
    %v579 = vld [vmem:[%s577 + $0x8] sm:$0xff]
    %v580 = vpack.c.bf16 %v579, %v578
    %581 = vmatpush.bf16.msra.mxu0 0
    %582 = vmatpush.bf16.msra.mxu0 0
    %583 = vmatpush.bf16.msra.mxu0 0
    %584 = vmatpush.bf16.msra.mxu0 0
    %585 = vmatpush.bf16.msra.mxu0 0
    %586 = vmatpush.bf16.msra.mxu0 0
    %587 = vmatpush.bf16.msra.mxu0 0
    %588 = vmatpush.bf16.msra.mxu0 %v580
    %589 = vmatmul.bf16.gmra.mxu0 %v100
    %v590 = vpop.f32.mrf.mxu0
    %v591 = vadd.f32 0.0, %v590
    %v592 = vpop.f32.mrf.mxu0
    %v593 = vadd.f32 0.0, %v592
    %594 = vdwg.mxu0
    %v595 = vpack.c.bf16 %v593, %v591
    %v597 = vsel %vm98, %v595, 0
    %599 = vmatpush.bf16.msra.mxu0 0
    %600 = vmatpush.bf16.msra.mxu0 0
    %601 = vmatpush.bf16.msra.mxu0 0
    %602 = vmatpush.bf16.msra.mxu0 0
    %603 = vmatpush.bf16.msra.mxu0 0
    %604 = vmatpush.bf16.msra.mxu0 0
    %605 = vmatpush.bf16.msra.mxu0 0
    %606 = vmatpush.bf16.msra.mxu0 %v121
    %607 = vmatmul.bf16.gmra.mxu0 %v597
    %v608 = vpop.f32.mrf.mxu0
    %v609 = vadd.f32 0.0, %v608
    %v610 = vpop.f32.mrf.mxu0
    %v611 = vadd.f32 0.0, %v610
    %612 = vdwg.mxu0
    %v613 = vmul.f32 %v609, 0.0010405828
    %v614 = vmul.f32 %v611, 0.0010405828
    %v615 = vsub.f32 %v613, %v578
    %v616 = vsub.f32 %v614, %v579
    %v617 = vand.u32 2147483647, %v615
    %v618 = vand.u32 2147483647, %v616
    %v619 = vmul.f32 %v617, 5.0
    %v620 = vmul.f32 %v618, 5.0
    %v621 = vadd.f32 %v619, 1.0
    %v622 = vadd.f32 %v620, 1.0
    %v623 = vand.u32 2147483647, %v575
    %v624 = vand.u32 2147483647, %v576
    %v625 = vsub.f32 0.0, %v623
    %v626 = vsub.f32 0.0, %v624
    %v627 = vmul.f32 %v625, 1.442695
    %v628 = vpow.pop %v627
    %v629 = vmul.f32 %v626, 1.442695
    %v630 = vpow.pop %v629
    %v631 = vmax.f32 %v575, 0.0
    %v632 = vmax.f32 %v576, 0.0
    %v633 = vmul.f32 %v575, %v578
    %v634 = vmul.f32 %v576, %v579
    %v635 = vsub.f32 %v631, %v633
    %v636 = vsub.f32 %v632, %v634
    %v637 = vadd.f32 %v628, 1.0
    %v638 = vadd.f32 %v630, 1.0
    %v639 = vlog2.pop %v637
    %v640 = vmul.f32 %v639, 0.6931472
    %v641 = vlog2.pop %v638
    %v642 = vmul.f32 %v641, 0.6931472
    %v643 = vadd.f32 %v635, %v640
    %v644 = vadd.f32 %v636, %v642
    %v645 = vrcp.pop %v637
    %v646 = vmul.f32 %v637, %v645
    %v647 = vsub.f32 1.0, %v646
    %v648 = vmul.f32 %v645, %v647
    %v649 = vadd.f32 %v645, %v648
    %vm650 = vweird.f32 %v637
    %vm651 = vweird.f32 %v645
    %vm652 = vmor %vm650, %vm651
    %v653 = vsel %vm652, %v645, %v649
    %v654 = vand.u32 2147483647, %v637
    %vm655 = vcmp.eq.f32.partialorder %v654, 8.507059e+37
    %v656 = vand.u32 %v637, 2147483648
    %v657 = vor.u32 1.1754944e-38, %v656
    %v658 = vsel %vm655, %v657, %v653
    %v659 = vrcp.pop %v638
    %v660 = vmul.f32 %v638, %v659
    %v661 = vsub.f32 1.0, %v660
    %v662 = vmul.f32 %v659, %v661
    %v663 = vadd.f32 %v659, %v662
    %vm664 = vweird.f32 %v638
    %vm665 = vweird.f32 %v659
    %vm666 = vmor %vm664, %vm665
    %v667 = vsel %vm666, %v659, %v663
    %v668 = vand.u32 2147483647, %v638
    %vm669 = vcmp.eq.f32.partialorder %v668, 8.507059e+37
    %v670 = vand.u32 %v638, 2147483648
    %v671 = vor.u32 1.1754944e-38, %v670
    %v672 = vsel %vm669, %v671, %v667
    %vm673 = vcmp.ge.f32.partialorder %v575, 0.0
    %vm674 = vcmp.ge.f32.partialorder %v576, 0.0
    %v675 = vmul.f32 %v628, %v658
    %v676 = vmul.f32 %v630, %v672
    %v677 = vsel %vm673, %v658, %v675
    %v678 = vsel %vm674, %v672, %v676
    %v679 = vsel %vm98, %v643, 0.0
    %v680 = vsel %vm98, %v644, 0.0
    %v681 = vadd.f32 %v679, %v680
    %682 = vadd.xlane.f32.xlu0 %v681
    %v683 = vpop.xlane.xlu0 %682
    %v684 = vrot.slane %v683, 4
    %v685 = vadd.f32 %v683, %v684
    %v686 = vrot.slane %v685, 2
    %v687 = vadd.f32 %v685, %v686
    %v688 = vrot.slane %v687, 1
    %v689 = vadd.f32 %v687, %v688
    %s690 = vtos %v689
    %v691 = vmul.f32 %v677, %v578
    %v692 = vmul.f32 %v678, %v579
    %v693 = vmul.f32 %v691, %v621
    %v694 = vmul.f32 %v692, %v622
    %v695 = vsel %vm98, %v693, 0.0
    %v696 = vsel %vm98, %v694, 0.0
    %v697 = vadd.f32 %v695, %v696
    %698 = vadd.xlane.f32.xlu0 %v697
    %v699 = vpop.xlane.xlu0 %698
    %v700 = vrot.slane %v699, 4
    %v701 = vadd.f32 %v699, %v700
    %v702 = vrot.slane %v701, 2
    %v703 = vadd.f32 %v701, %v702
    %v704 = vrot.slane %v703, 1
    %v705 = vadd.f32 %v703, %v704
    %s706 = vtos %v705
    %v707 = vadd.f32 %v677, %v578
    %v708 = vadd.f32 %v678, %v579
    %v709 = vmul.f32 %v707, %v621
    %v710 = vmul.f32 %v708, %v622
    %v711 = vsel %vm98, %v709, 0.0
    %v712 = vsel %vm98, %v710, 0.0
    %v713 = vadd.f32 %v711, %v712
    %714 = vadd.xlane.f32.xlu0 %v713
    %v715 = vpop.xlane.xlu0 %714
    %v716 = vrot.slane %v715, 4
    %v717 = vadd.f32 %v715, %v716
    %v718 = vrot.slane %v717, 2
    %v719 = vadd.f32 %v717, %v718
    %v720 = vrot.slane %v719, 1
    %v721 = vadd.f32 %v719, %v720
    %s722 = vtos %v721
    %v723 = vstv %s722
    %v724 = vsel %vm252, %v723, 0.0
    %v725 = vstv %s706
    %v726 = vsel %vm251, %v725, %v724
    %v727 = vstv %s690
    %v728 = vsel %vm250, %v727, %v726
    %s729 = scalar_lea.vmem [#allocation10], 24
    %730 = vst [vmem:[%s729] sm:$0xff] %v728
    %s731 = scalar_lea.vmem [#allocation7], 64
    %v732 = vld [vmem:[%s731] sm:$0xff]
    %v733 = vld [vmem:[%s731 + $0x8] sm:$0xff]
    %s734 = scalar_lea.vmem [#allocation8], 64
    %v735 = vld [vmem:[%s734] sm:$0xff]
    %v736 = vld [vmem:[%s734 + $0x8] sm:$0xff]
    %v737 = vpack.c.bf16 %v736, %v735
    %738 = vmatpush.bf16.msra.mxu0 0
    %739 = vmatpush.bf16.msra.mxu0 0
    %740 = vmatpush.bf16.msra.mxu0 0
    %741 = vmatpush.bf16.msra.mxu0 0
    %742 = vmatpush.bf16.msra.mxu0 0
    %743 = vmatpush.bf16.msra.mxu0 0
    %744 = vmatpush.bf16.msra.mxu0 0
    %745 = vmatpush.bf16.msra.mxu0 %v737
    %746 = vmatmul.bf16.gmra.mxu0 %v100
    %v747 = vpop.f32.mrf.mxu0
    %v748 = vadd.f32 0.0, %v747
    %v749 = vpop.f32.mrf.mxu0
    %v750 = vadd.f32 0.0, %v749
    %751 = vdwg.mxu0
    %v752 = vpack.c.bf16 %v750, %v748
    %v754 = vsel %vm98, %v752, 0
    %756 = vmatpush.bf16.msra.mxu0 0
    %757 = vmatpush.bf16.msra.mxu0 0
    %758 = vmatpush.bf16.msra.mxu0 0
    %759 = vmatpush.bf16.msra.mxu0 0
    %760 = vmatpush.bf16.msra.mxu0 0
    %761 = vmatpush.bf16.msra.mxu0 0
    %762 = vmatpush.bf16.msra.mxu0 0
    %763 = vmatpush.bf16.msra.mxu0 %v121
    %764 = vmatmul.bf16.gmra.mxu0 %v754
    %v765 = vpop.f32.mrf.mxu0
    %v766 = vadd.f32 0.0, %v765
    %v767 = vpop.f32.mrf.mxu0
    %v768 = vadd.f32 0.0, %v767
    %769 = vdwg.mxu0
    %v770 = vmul.f32 %v766, 0.0010405828
    %v771 = vmul.f32 %v768, 0.0010405828
    %v772 = vsub.f32 %v770, %v735
    %v773 = vsub.f32 %v771, %v736
    %v774 = vand.u32 2147483647, %v772
    %v775 = vand.u32 2147483647, %v773
    %v776 = vmul.f32 %v774, 5.0
    %v777 = vmul.f32 %v775, 5.0
    %v778 = vadd.f32 %v776, 1.0
    %v779 = vadd.f32 %v777, 1.0
    %v780 = vand.u32 2147483647, %v732
    %v781 = vand.u32 2147483647, %v733
    %v782 = vsub.f32 0.0, %v780
    %v783 = vsub.f32 0.0, %v781
    %v784 = vmul.f32 %v782, 1.442695
    %v785 = vpow.pop %v784
    %v786 = vmul.f32 %v783, 1.442695
    %v787 = vpow.pop %v786
    %v788 = vmax.f32 %v732, 0.0
    %v789 = vmax.f32 %v733, 0.0
    %v790 = vmul.f32 %v732, %v735
    %v791 = vmul.f32 %v733, %v736
    %v792 = vsub.f32 %v788, %v790
    %v793 = vsub.f32 %v789, %v791
    %v794 = vadd.f32 %v785, 1.0
    %v795 = vadd.f32 %v787, 1.0
    %v796 = vlog2.pop %v794
    %v797 = vmul.f32 %v796, 0.6931472
    %v798 = vlog2.pop %v795
    %v799 = vmul.f32 %v798, 0.6931472
    %v800 = vadd.f32 %v792, %v797
    %v801 = vadd.f32 %v793, %v799
    %v802 = vrcp.pop %v794
    %v803 = vmul.f32 %v794, %v802
    %v804 = vsub.f32 1.0, %v803
    %v805 = vmul.f32 %v802, %v804
    %v806 = vadd.f32 %v802, %v805
    %vm807 = vweird.f32 %v794
    %vm808 = vweird.f32 %v802
    %vm809 = vmor %vm807, %vm808
    %v810 = vsel %vm809, %v802, %v806
    %v811 = vand.u32 2147483647, %v794
    %vm812 = vcmp.eq.f32.partialorder %v811, 8.507059e+37
    %v813 = vand.u32 %v794, 2147483648
    %v814 = vor.u32 1.1754944e-38, %v813
    %v815 = vsel %vm812, %v814, %v810
    %v816 = vrcp.pop %v795
    %v817 = vmul.f32 %v795, %v816
    %v818 = vsub.f32 1.0, %v817
    %v819 = vmul.f32 %v816, %v818
    %v820 = vadd.f32 %v816, %v819
    %vm821 = vweird.f32 %v795
    %vm822 = vweird.f32 %v816
    %vm823 = vmor %vm821, %vm822
    %v824 = vsel %vm823, %v816, %v820
    %v825 = vand.u32 2147483647, %v795
    %vm826 = vcmp.eq.f32.partialorder %v825, 8.507059e+37
    %v827 = vand.u32 %v795, 2147483648
    %v828 = vor.u32 1.1754944e-38, %v827
    %v829 = vsel %vm826, %v828, %v824
    %vm830 = vcmp.ge.f32.partialorder %v732, 0.0
    %vm831 = vcmp.ge.f32.partialorder %v733, 0.0
    %v832 = vmul.f32 %v785, %v815
    %v833 = vmul.f32 %v787, %v829
    %v834 = vsel %vm830, %v815, %v832
    %v835 = vsel %vm831, %v829, %v833
    %v836 = vsel %vm98, %v800, 0.0
    %v837 = vsel %vm98, %v801, 0.0
    %v838 = vadd.f32 %v836, %v837
    %839 = vadd.xlane.f32.xlu0 %v838
    %v840 = vpop.xlane.xlu0 %839
    %v841 = vrot.slane %v840, 4
    %v842 = vadd.f32 %v840, %v841
    %v843 = vrot.slane %v842, 2
    %v844 = vadd.f32 %v842, %v843
    %v845 = vrot.slane %v844, 1
    %v846 = vadd.f32 %v844, %v845
    %s847 = vtos %v846
    %v848 = vmul.f32 %v834, %v735
    %v849 = vmul.f32 %v835, %v736
    %v850 = vmul.f32 %v848, %v778
    %v851 = vmul.f32 %v849, %v779
    %v852 = vsel %vm98, %v850, 0.0
    %v853 = vsel %vm98, %v851, 0.0
    %v854 = vadd.f32 %v852, %v853
    %855 = vadd.xlane.f32.xlu0 %v854
    %v856 = vpop.xlane.xlu0 %855
    %v857 = vrot.slane %v856, 4
    %v858 = vadd.f32 %v856, %v857
    %v859 = vrot.slane %v858, 2
    %v860 = vadd.f32 %v858, %v859
    %v861 = vrot.slane %v860, 1
    %v862 = vadd.f32 %v860, %v861
    %s863 = vtos %v862
    %v864 = vadd.f32 %v834, %v735
    %v865 = vadd.f32 %v835, %v736
    %v866 = vmul.f32 %v864, %v778
    %v867 = vmul.f32 %v865, %v779
    %v868 = vsel %vm98, %v866, 0.0
    %v869 = vsel %vm98, %v867, 0.0
    %v870 = vadd.f32 %v868, %v869
    %871 = vadd.xlane.f32.xlu0 %v870
    %v872 = vpop.xlane.xlu0 %871
    %v873 = vrot.slane %v872, 4
    %v874 = vadd.f32 %v872, %v873
    %v875 = vrot.slane %v874, 2
    %v876 = vadd.f32 %v874, %v875
    %v877 = vrot.slane %v876, 1
    %v878 = vadd.f32 %v876, %v877
    %s879 = vtos %v878
    %v880 = vstv %s879
    %v881 = vsel %vm252, %v880, 0.0
    %v882 = vstv %s863
    %v883 = vsel %vm251, %v882, %v881
    %v884 = vstv %s847
    %v885 = vsel %vm250, %v884, %v883
    %s886 = scalar_lea.vmem [#allocation10], 32
    %887 = vst [vmem:[%s886] sm:$0xff] %v885
    %s888 = scalar_lea.vmem [#allocation7], 80
    %v889 = vld [vmem:[%s888] sm:$0xff]
    %v890 = vld [vmem:[%s888 + $0x8] sm:$0xff]
    %s891 = scalar_lea.vmem [#allocation8], 80
    %v892 = vld [vmem:[%s891] sm:$0xff]
    %v893 = vld [vmem:[%s891 + $0x8] sm:$0xff]
    %v894 = vpack.c.bf16 %v893, %v892
    %895 = vmatpush.bf16.msra.mxu0 0
    %896 = vmatpush.bf16.msra.mxu0 0
    %897 = vmatpush.bf16.msra.mxu0 0
    %898 = vmatpush.bf16.msra.mxu0 0
    %899 = vmatpush.bf16.msra.mxu0 0
    %900 = vmatpush.bf16.msra.mxu0 0
    %901 = vmatpush.bf16.msra.mxu0 0
    %902 = vmatpush.bf16.msra.mxu0 %v894
    %903 = vmatmul.bf16.gmra.mxu0 %v100
    %v904 = vpop.f32.mrf.mxu0
    %v905 = vadd.f32 0.0, %v904
    %v906 = vpop.f32.mrf.mxu0
    %v907 = vadd.f32 0.0, %v906
    %908 = vdwg.mxu0
    %v909 = vpack.c.bf16 %v907, %v905
    %v911 = vsel %vm98, %v909, 0
    %913 = vmatpush.bf16.msra.mxu0 0
    %914 = vmatpush.bf16.msra.mxu0 0
    %915 = vmatpush.bf16.msra.mxu0 0
    %916 = vmatpush.bf16.msra.mxu0 0
    %917 = vmatpush.bf16.msra.mxu0 0
    %918 = vmatpush.bf16.msra.mxu0 0
    %919 = vmatpush.bf16.msra.mxu0 0
    %920 = vmatpush.bf16.msra.mxu0 %v121
    %921 = vmatmul.bf16.gmra.mxu0 %v911
    %v922 = vpop.f32.mrf.mxu0
    %v923 = vadd.f32 0.0, %v922
    %v924 = vpop.f32.mrf.mxu0
    %v925 = vadd.f32 0.0, %v924
    %926 = vdwg.mxu0
    %v927 = vmul.f32 %v923, 0.0010405828
    %v928 = vmul.f32 %v925, 0.0010405828
    %v929 = vsub.f32 %v927, %v892
    %v930 = vsub.f32 %v928, %v893
    %v931 = vand.u32 2147483647, %v929
    %v932 = vand.u32 2147483647, %v930
    %v933 = vmul.f32 %v931, 5.0
    %v934 = vmul.f32 %v932, 5.0
    %v935 = vadd.f32 %v933, 1.0
    %v936 = vadd.f32 %v934, 1.0
    %v937 = vand.u32 2147483647, %v889
    %v938 = vand.u32 2147483647, %v890
    %v939 = vsub.f32 0.0, %v937
    %v940 = vsub.f32 0.0, %v938
    %v941 = vmul.f32 %v939, 1.442695
    %v942 = vpow.pop %v941
    %v943 = vmul.f32 %v940, 1.442695
    %v944 = vpow.pop %v943
    %v945 = vmax.f32 %v889, 0.0
    %v946 = vmax.f32 %v890, 0.0
    %v947 = vmul.f32 %v889, %v892
    %v948 = vmul.f32 %v890, %v893
    %v949 = vsub.f32 %v945, %v947
    %v950 = vsub.f32 %v946, %v948
    %v951 = vadd.f32 %v942, 1.0
    %v952 = vadd.f32 %v944, 1.0
    %v953 = vlog2.pop %v951
    %v954 = vmul.f32 %v953, 0.6931472
    %v955 = vlog2.pop %v952
    %v956 = vmul.f32 %v955, 0.6931472
    %v957 = vadd.f32 %v949, %v954
    %v958 = vadd.f32 %v950, %v956
    %v959 = vrcp.pop %v951
    %v960 = vmul.f32 %v951, %v959
    %v961 = vsub.f32 1.0, %v960
    %v962 = vmul.f32 %v959, %v961
    %v963 = vadd.f32 %v959, %v962
    %vm964 = vweird.f32 %v951
    %vm965 = vweird.f32 %v959
    %vm966 = vmor %vm964, %vm965
    %v967 = vsel %vm966, %v959, %v963
    %v968 = vand.u32 2147483647, %v951
    %vm969 = vcmp.eq.f32.partialorder %v968, 8.507059e+37
    %v970 = vand.u32 %v951, 2147483648
    %v971 = vor.u32 1.1754944e-38, %v970
    %v972 = vsel %vm969, %v971, %v967
    %v973 = vrcp.pop %v952
    %v974 = vmul.f32 %v952, %v973
    %v975 = vsub.f32 1.0, %v974
    %v976 = vmul.f32 %v973, %v975
    %v977 = vadd.f32 %v973, %v976
    %vm978 = vweird.f32 %v952
    %vm979 = vweird.f32 %v973
    %vm980 = vmor %vm978, %vm979
    %v981 = vsel %vm980, %v973, %v977
    %v982 = vand.u32 2147483647, %v952
    %vm983 = vcmp.eq.f32.partialorder %v982, 8.507059e+37
    %v984 = vand.u32 %v952, 2147483648
    %v985 = vor.u32 1.1754944e-38, %v984
    %v986 = vsel %vm983, %v985, %v981
    %vm987 = vcmp.ge.f32.partialorder %v889, 0.0
    %vm988 = vcmp.ge.f32.partialorder %v890, 0.0
    %v989 = vmul.f32 %v942, %v972
    %v990 = vmul.f32 %v944, %v986
    %v991 = vsel %vm987, %v972, %v989
    %v992 = vsel %vm988, %v986, %v990
    %v993 = vsel %vm98, %v957, 0.0
    %v994 = vsel %vm98, %v958, 0.0
    %v995 = vadd.f32 %v993, %v994
    %996 = vadd.xlane.f32.xlu0 %v995
    %v997 = vpop.xlane.xlu0 %996
    %v998 = vrot.slane %v997, 4
    %v999 = vadd.f32 %v997, %v998
    %v1000 = vrot.slane %v999, 2
    %v1001 = vadd.f32 %v999, %v1000
    %v1002 = vrot.slane %v1001, 1
    %v1003 = vadd.f32 %v1001, %v1002
    %s1004 = vtos %v1003
    %v1005 = vmul.f32 %v991, %v892
    %v1006 = vmul.f32 %v992, %v893
    %v1007 = vmul.f32 %v1005, %v935
    %v1008 = vmul.f32 %v1006, %v936
    %v1009 = vsel %vm98, %v1007, 0.0
    %v1010 = vsel %vm98, %v1008, 0.0
    %v1011 = vadd.f32 %v1009, %v1010
    %1012 = vadd.xlane.f32.xlu0 %v1011
    %v1013 = vpop.xlane.xlu0 %1012
    %v1014 = vrot.slane %v1013, 4
    %v1015 = vadd.f32 %v1013, %v1014
    %v1016 = vrot.slane %v1015, 2
    %v1017 = vadd.f32 %v1015, %v1016
    %v1018 = vrot.slane %v1017, 1
    %v1019 = vadd.f32 %v1017, %v1018
    %s1020 = vtos %v1019
    %v1021 = vadd.f32 %v991, %v892
    %v1022 = vadd.f32 %v992, %v893
    %v1023 = vmul.f32 %v1021, %v935
    %v1024 = vmul.f32 %v1022, %v936
    %v1025 = vsel %vm98, %v1023, 0.0
    %v1026 = vsel %vm98, %v1024, 0.0
    %v1027 = vadd.f32 %v1025, %v1026
    %1028 = vadd.xlane.f32.xlu0 %v1027
    %v1029 = vpop.xlane.xlu0 %1028
    %v1030 = vrot.slane %v1029, 4
    %v1031 = vadd.f32 %v1029, %v1030
    %v1032 = vrot.slane %v1031, 2
    %v1033 = vadd.f32 %v1031, %v1032
    %v1034 = vrot.slane %v1033, 1
    %v1035 = vadd.f32 %v1033, %v1034
    %s1036 = vtos %v1035
    %v1037 = vstv %s1036
    %v1038 = vsel %vm252, %v1037, 0.0
    %v1039 = vstv %s1020
    %v1040 = vsel %vm251, %v1039, %v1038
    %v1041 = vstv %s1004
    %v1042 = vsel %vm250, %v1041, %v1040
    %s1043 = scalar_lea.vmem [#allocation10], 40
    %1044 = vst [vmem:[%s1043] sm:$0xff] %v1042
    %s1045 = scalar_lea.vmem [#allocation7], 96
    %v1046 = vld [vmem:[%s1045] sm:$0xff]
    %v1047 = vld [vmem:[%s1045 + $0x8] sm:$0xff]
    %s1048 = scalar_lea.vmem [#allocation8], 96
    %v1049 = vld [vmem:[%s1048] sm:$0xff]
    %v1050 = vld [vmem:[%s1048 + $0x8] sm:$0xff]
    %v1051 = vpack.c.bf16 %v1050, %v1049
    %1052 = vmatpush.bf16.msra.mxu0 0
    %1053 = vmatpush.bf16.msra.mxu0 0
    %1054 = vmatpush.bf16.msra.mxu0 0
    %1055 = vmatpush.bf16.msra.mxu0 0
    %1056 = vmatpush.bf16.msra.mxu0 0
    %1057 = vmatpush.bf16.msra.mxu0 0
    %1058 = vmatpush.bf16.msra.mxu0 0
    %1059 = vmatpush.bf16.msra.mxu0 %v1051
    %1060 = vmatmul.bf16.gmra.mxu0 %v100
    %v1061 = vpop.f32.mrf.mxu0
    %v1062 = vadd.f32 0.0, %v1061
    %v1063 = vpop.f32.mrf.mxu0
    %v1064 = vadd.f32 0.0, %v1063
    %1065 = vdwg.mxu0
    %v1066 = vpack.c.bf16 %v1064, %v1062
    %v1068 = vsel %vm98, %v1066, 0
    %1070 = vmatpush.bf16.msra.mxu0 0
    %1071 = vmatpush.bf16.msra.mxu0 0
    %1072 = vmatpush.bf16.msra.mxu0 0
    %1073 = vmatpush.bf16.msra.mxu0 0
    %1074 = vmatpush.bf16.msra.mxu0 0
    %1075 = vmatpush.bf16.msra.mxu0 0
    %1076 = vmatpush.bf16.msra.mxu0 0
    %1077 = vmatpush.bf16.msra.mxu0 %v121
    %1078 = vmatmul.bf16.gmra.mxu0 %v1068
    %v1079 = vpop.f32.mrf.mxu0
    %v1080 = vadd.f32 0.0, %v1079
    %v1081 = vpop.f32.mrf.mxu0
    %v1082 = vadd.f32 0.0, %v1081
    %1083 = vdwg.mxu0
    %v1084 = vmul.f32 %v1080, 0.0010405828
    %v1085 = vmul.f32 %v1082, 0.0010405828
    %v1086 = vsub.f32 %v1084, %v1049
    %v1087 = vsub.f32 %v1085, %v1050
    %v1088 = vand.u32 2147483647, %v1086
    %v1089 = vand.u32 2147483647, %v1087
    %v1090 = vmul.f32 %v1088, 5.0
    %v1091 = vmul.f32 %v1089, 5.0
    %v1092 = vadd.f32 %v1090, 1.0
    %v1093 = vadd.f32 %v1091, 1.0
    %v1094 = vand.u32 2147483647, %v1046
    %v1095 = vand.u32 2147483647, %v1047
    %v1096 = vsub.f32 0.0, %v1094
    %v1097 = vsub.f32 0.0, %v1095
    %v1098 = vmul.f32 %v1096, 1.442695
    %v1099 = vpow.pop %v1098
    %v1100 = vmul.f32 %v1097, 1.442695
    %v1101 = vpow.pop %v1100
    %v1102 = vmax.f32 %v1046, 0.0
    %v1103 = vmax.f32 %v1047, 0.0
    %v1104 = vmul.f32 %v1046, %v1049
    %v1105 = vmul.f32 %v1047, %v1050
    %v1106 = vsub.f32 %v1102, %v1104
    %v1107 = vsub.f32 %v1103, %v1105
    %v1108 = vadd.f32 %v1099, 1.0
    %v1109 = vadd.f32 %v1101, 1.0
    %v1110 = vlog2.pop %v1108
    %v1111 = vmul.f32 %v1110, 0.6931472
    %v1112 = vlog2.pop %v1109
    %v1113 = vmul.f32 %v1112, 0.6931472
    %v1114 = vadd.f32 %v1106, %v1111
    %v1115 = vadd.f32 %v1107, %v1113
    %v1116 = vrcp.pop %v1108
    %v1117 = vmul.f32 %v1108, %v1116
    %v1118 = vsub.f32 1.0, %v1117
    %v1119 = vmul.f32 %v1116, %v1118
    %v1120 = vadd.f32 %v1116, %v1119
    %vm1121 = vweird.f32 %v1108
    %vm1122 = vweird.f32 %v1116
    %vm1123 = vmor %vm1121, %vm1122
    %v1124 = vsel %vm1123, %v1116, %v1120
    %v1125 = vand.u32 2147483647, %v1108
    %vm1126 = vcmp.eq.f32.partialorder %v1125, 8.507059e+37
    %v1127 = vand.u32 %v1108, 2147483648
    %v1128 = vor.u32 1.1754944e-38, %v1127
    %v1129 = vsel %vm1126, %v1128, %v1124
    %v1130 = vrcp.pop %v1109
    %v1131 = vmul.f32 %v1109, %v1130
    %v1132 = vsub.f32 1.0, %v1131
    %v1133 = vmul.f32 %v1130, %v1132
    %v1134 = vadd.f32 %v1130, %v1133
    %vm1135 = vweird.f32 %v1109
    %vm1136 = vweird.f32 %v1130
    %vm1137 = vmor %vm1135, %vm1136
    %v1138 = vsel %vm1137, %v1130, %v1134
    %v1139 = vand.u32 2147483647, %v1109
    %vm1140 = vcmp.eq.f32.partialorder %v1139, 8.507059e+37
    %v1141 = vand.u32 %v1109, 2147483648
    %v1142 = vor.u32 1.1754944e-38, %v1141
    %v1143 = vsel %vm1140, %v1142, %v1138
    %vm1144 = vcmp.ge.f32.partialorder %v1046, 0.0
    %vm1145 = vcmp.ge.f32.partialorder %v1047, 0.0
    %v1146 = vmul.f32 %v1099, %v1129
    %v1147 = vmul.f32 %v1101, %v1143
    %v1148 = vsel %vm1144, %v1129, %v1146
    %v1149 = vsel %vm1145, %v1143, %v1147
    %v1150 = vsel %vm98, %v1114, 0.0
    %v1151 = vsel %vm98, %v1115, 0.0
    %v1152 = vadd.f32 %v1150, %v1151
    %1153 = vadd.xlane.f32.xlu0 %v1152
    %v1154 = vpop.xlane.xlu0 %1153
    %v1155 = vrot.slane %v1154, 4
    %v1156 = vadd.f32 %v1154, %v1155
    %v1157 = vrot.slane %v1156, 2
    %v1158 = vadd.f32 %v1156, %v1157
    %v1159 = vrot.slane %v1158, 1
    %v1160 = vadd.f32 %v1158, %v1159
    %s1161 = vtos %v1160
    %v1162 = vmul.f32 %v1148, %v1049
    %v1163 = vmul.f32 %v1149, %v1050
    %v1164 = vmul.f32 %v1162, %v1092
    %v1165 = vmul.f32 %v1163, %v1093
    %v1166 = vsel %vm98, %v1164, 0.0
    %v1167 = vsel %vm98, %v1165, 0.0
    %v1168 = vadd.f32 %v1166, %v1167
    %1169 = vadd.xlane.f32.xlu0 %v1168
    %v1170 = vpop.xlane.xlu0 %1169
    %v1171 = vrot.slane %v1170, 4
    %v1172 = vadd.f32 %v1170, %v1171
    %v1173 = vrot.slane %v1172, 2
    %v1174 = vadd.f32 %v1172, %v1173
    %v1175 = vrot.slane %v1174, 1
    %v1176 = vadd.f32 %v1174, %v1175
    %s1177 = vtos %v1176
    %v1178 = vadd.f32 %v1148, %v1049
    %v1179 = vadd.f32 %v1149, %v1050
    %v1180 = vmul.f32 %v1178, %v1092
    %v1181 = vmul.f32 %v1179, %v1093
    %v1182 = vsel %vm98, %v1180, 0.0
    %v1183 = vsel %vm98, %v1181, 0.0
    %v1184 = vadd.f32 %v1182, %v1183
    %1185 = vadd.xlane.f32.xlu0 %v1184
    %v1186 = vpop.xlane.xlu0 %1185
    %v1187 = vrot.slane %v1186, 4
    %v1188 = vadd.f32 %v1186, %v1187
    %v1189 = vrot.slane %v1188, 2
    %v1190 = vadd.f32 %v1188, %v1189
    %v1191 = vrot.slane %v1190, 1
    %v1192 = vadd.f32 %v1190, %v1191
    %s1193 = vtos %v1192
    %v1194 = vstv %s1193
    %v1195 = vsel %vm252, %v1194, 0.0
    %v1196 = vstv %s1177
    %v1197 = vsel %vm251, %v1196, %v1195
    %v1198 = vstv %s1161
    %v1199 = vsel %vm250, %v1198, %v1197
    %s1200 = scalar_lea.vmem [#allocation10], 48
    %1201 = vst [vmem:[%s1200] sm:$0xff] %v1199
    %s1202 = scalar_lea.vmem [#allocation7], 112
    %v1203 = vld [vmem:[%s1202] sm:$0xff]
    %v1204 = vld [vmem:[%s1202 + $0x8] sm:$0xff]
    %s1205 = scalar_lea.vmem [#allocation8], 112
    %v1206 = vld [vmem:[%s1205] sm:$0xff]
    %v1207 = vld [vmem:[%s1205 + $0x8] sm:$0xff]
    %v1208 = vpack.c.bf16 %v1207, %v1206
    %1209 = vmatpush.bf16.msra.mxu0 0
    %1210 = vmatpush.bf16.msra.mxu0 0
    %1211 = vmatpush.bf16.msra.mxu0 0
    %1212 = vmatpush.bf16.msra.mxu0 0
    %1213 = vmatpush.bf16.msra.mxu0 0
    %1214 = vmatpush.bf16.msra.mxu0 0
    %1215 = vmatpush.bf16.msra.mxu0 0
    %1216 = vmatpush.bf16.msra.mxu0 %v1208
    %1217 = vmatmul.bf16.gmra.mxu0 %v100
    %v1218 = vpop.f32.mrf.mxu0
    %v1219 = vadd.f32 0.0, %v1218
    %v1220 = vpop.f32.mrf.mxu0
    %v1221 = vadd.f32 0.0, %v1220
    %1222 = vdwg.mxu0
    %v1223 = vpack.c.bf16 %v1221, %v1219
    %v1225 = vsel %vm98, %v1223, 0
    %1227 = vmatpush.bf16.msra.mxu0 0
    %1228 = vmatpush.bf16.msra.mxu0 0
    %1229 = vmatpush.bf16.msra.mxu0 0
    %1230 = vmatpush.bf16.msra.mxu0 0
    %1231 = vmatpush.bf16.msra.mxu0 0
    %1232 = vmatpush.bf16.msra.mxu0 0
    %1233 = vmatpush.bf16.msra.mxu0 0
    %1234 = vmatpush.bf16.msra.mxu0 %v121
    %1235 = vmatmul.bf16.gmra.mxu0 %v1225
    %v1236 = vpop.f32.mrf.mxu0
    %v1237 = vadd.f32 0.0, %v1236
    %v1238 = vpop.f32.mrf.mxu0
    %v1239 = vadd.f32 0.0, %v1238
    %1240 = vdwg.mxu0
    %v1241 = vmul.f32 %v1237, 0.0010405828
    %v1242 = vmul.f32 %v1239, 0.0010405828
    %v1243 = vsub.f32 %v1241, %v1206
    %v1244 = vsub.f32 %v1242, %v1207
    %v1245 = vand.u32 2147483647, %v1243
    %v1246 = vand.u32 2147483647, %v1244
    %v1247 = vmul.f32 %v1245, 5.0
    %v1248 = vmul.f32 %v1246, 5.0
    %v1249 = vadd.f32 %v1247, 1.0
    %v1250 = vadd.f32 %v1248, 1.0
    %v1251 = vand.u32 2147483647, %v1203
    %v1252 = vand.u32 2147483647, %v1204
    %v1253 = vsub.f32 0.0, %v1251
    %v1254 = vsub.f32 0.0, %v1252
    %v1255 = vmul.f32 %v1253, 1.442695
    %v1256 = vpow.pop %v1255
    %v1257 = vmul.f32 %v1254, 1.442695
    %v1258 = vpow.pop %v1257
    %v1259 = vmax.f32 %v1203, 0.0
    %v1260 = vmax.f32 %v1204, 0.0
    %v1261 = vmul.f32 %v1203, %v1206
    %v1262 = vmul.f32 %v1204, %v1207
    %v1263 = vsub.f32 %v1259, %v1261
    %v1264 = vsub.f32 %v1260, %v1262
    %v1265 = vadd.f32 %v1256, 1.0
    %v1266 = vadd.f32 %v1258, 1.0
    %v1267 = vlog2.pop %v1265
    %v1268 = vmul.f32 %v1267, 0.6931472
    %v1269 = vlog2.pop %v1266
    %v1270 = vmul.f32 %v1269, 0.6931472
    %v1271 = vadd.f32 %v1263, %v1268
    %v1272 = vadd.f32 %v1264, %v1270
    %v1273 = vrcp.pop %v1265
    %v1274 = vmul.f32 %v1265, %v1273
    %v1275 = vsub.f32 1.0, %v1274
    %v1276 = vmul.f32 %v1273, %v1275
    %v1277 = vadd.f32 %v1273, %v1276
    %vm1278 = vweird.f32 %v1265
    %vm1279 = vweird.f32 %v1273
    %vm1280 = vmor %vm1278, %vm1279
    %v1281 = vsel %vm1280, %v1273, %v1277
    %v1282 = vand.u32 2147483647, %v1265
    %vm1283 = vcmp.eq.f32.partialorder %v1282, 8.507059e+37
    %v1284 = vand.u32 %v1265, 2147483648
    %v1285 = vor.u32 1.1754944e-38, %v1284
    %v1286 = vsel %vm1283, %v1285, %v1281
    %v1287 = vrcp.pop %v1266
    %v1288 = vmul.f32 %v1266, %v1287
    %v1289 = vsub.f32 1.0, %v1288
    %v1290 = vmul.f32 %v1287, %v1289
    %v1291 = vadd.f32 %v1287, %v1290
    %vm1292 = vweird.f32 %v1266
    %vm1293 = vweird.f32 %v1287
    %vm1294 = vmor %vm1292, %vm1293
    %v1295 = vsel %vm1294, %v1287, %v1291
    %v1296 = vand.u32 2147483647, %v1266
    %vm1297 = vcmp.eq.f32.partialorder %v1296, 8.507059e+37
    %v1298 = vand.u32 %v1266, 2147483648
    %v1299 = vor.u32 1.1754944e-38, %v1298
    %v1300 = vsel %vm1297, %v1299, %v1295
    %vm1301 = vcmp.ge.f32.partialorder %v1203, 0.0
    %vm1302 = vcmp.ge.f32.partialorder %v1204, 0.0
    %v1303 = vmul.f32 %v1256, %v1286
    %v1304 = vmul.f32 %v1258, %v1300
    %v1305 = vsel %vm1301, %v1286, %v1303
    %v1306 = vsel %vm1302, %v1300, %v1304
    %v1307 = vsel %vm98, %v1271, 0.0
    %v1308 = vsel %vm98, %v1272, 0.0
    %v1309 = vadd.f32 %v1307, %v1308
    %1310 = vadd.xlane.f32.xlu0 %v1309
    %v1311 = vpop.xlane.xlu0 %1310
    %v1312 = vrot.slane %v1311, 4
    %v1313 = vadd.f32 %v1311, %v1312
    %v1314 = vrot.slane %v1313, 2
    %v1315 = vadd.f32 %v1313, %v1314
    %v1316 = vrot.slane %v1315, 1
    %v1317 = vadd.f32 %v1315, %v1316
    %s1318 = vtos %v1317
    %v1319 = vmul.f32 %v1305, %v1206
    %v1320 = vmul.f32 %v1306, %v1207
    %v1321 = vmul.f32 %v1319, %v1249
    %v1322 = vmul.f32 %v1320, %v1250
    %v1323 = vsel %vm98, %v1321, 0.0
    %v1324 = vsel %vm98, %v1322, 0.0
    %v1325 = vadd.f32 %v1323, %v1324
    %1326 = vadd.xlane.f32.xlu0 %v1325
    %v1327 = vpop.xlane.xlu0 %1326
    %v1328 = vrot.slane %v1327, 4
    %v1329 = vadd.f32 %v1327, %v1328
    %v1330 = vrot.slane %v1329, 2
    %v1331 = vadd.f32 %v1329, %v1330
    %v1332 = vrot.slane %v1331, 1
    %v1333 = vadd.f32 %v1331, %v1332
    %s1334 = vtos %v1333
    %v1335 = vadd.f32 %v1305, %v1206
    %v1336 = vadd.f32 %v1306, %v1207
    %v1337 = vmul.f32 %v1335, %v1249
    %v1338 = vmul.f32 %v1336, %v1250
    %v1339 = vsel %vm98, %v1337, 0.0
    %v1340 = vsel %vm98, %v1338, 0.0
    %v1341 = vadd.f32 %v1339, %v1340
    %1342 = vadd.xlane.f32.xlu0 %v1341
    %v1343 = vpop.xlane.xlu0 %1342
    %v1344 = vrot.slane %v1343, 4
    %v1345 = vadd.f32 %v1343, %v1344
    %v1346 = vrot.slane %v1345, 2
    %v1347 = vadd.f32 %v1345, %v1346
    %v1348 = vrot.slane %v1347, 1
    %v1349 = vadd.f32 %v1347, %v1348
    %s1350 = vtos %v1349
    %v1351 = vstv %s1350
    %v1352 = vsel %vm252, %v1351, 0.0
    %v1353 = vstv %s1334
    %v1354 = vsel %vm251, %v1353, %v1352
    %v1355 = vstv %s1318
    %v1356 = vsel %vm250, %v1355, %v1354
    %s1357 = scalar_lea.vmem [#allocation10], 56
    %1358 = vst [vmem:[%s1357] sm:$0xff] %v1356
    // Predicated region
    $region34: #{tpu_custom_call.1} parent=1 // pred_check
      _
    $region35: #{tpu_custom_call.1} parent=1 // pred_check_branch
      %1360 = sbr.rel (0) target = $region37
    $region36: #{tpu_custom_call.1} parent=1 // pred_region
      %1362 = vsyncadd [#allocation4], 0
      %s1363 = sshll.u32 [#allocation10], 4
      %s1364 = int_to_ptr.vmem [resolvable:$true] %s1363
      %s1365 = sshll.u32 %s4, 4
      %s1366 = int_to_ptr.hbm [resolvable:$true] %s1365
      %1371 = dma.vmem_to_hbm [thread:$0]  %s1364, 1024, %s1366, [#allocation4], 128, 128, 8
    $region37: #{tpu_custom_call.1} parent=1 // pred_fallthru
      _
    // Predicated region
    $region38: #{tpu_custom_call.1} parent=1 // pred_check
      _
    $region39: #{tpu_custom_call.1} parent=1 // pred_check_branch
      %1373 = sbr.rel (0) target = $region41
    $region40: #{tpu_custom_call.1} parent=1 // pred_region
      %1375 = dma.done [#allocation4], 1024
    $region41: #{tpu_custom_call.1} parent=1 // pred_fallthru
      _
    %1376 = vsyncpa [#allocation3], 1
    %1377 = vsyncpa [#allocation6], 1
    %1378 = vsyncpa [#allocation9], 1
    %1379 = vsyncpa [#allocation4], 1

</llo_original>
